<compile_context>
chip_gen: v6e
topology: v6e:2x2x1
jax: 0.10.0
libtpu: 0.0.40
codegen_flags: <defaults>
</compile_context>

<pallas_src>
import math

import jax
import jax.numpy as jnp
from jax.experimental import pallas as pl
from jax.experimental.pallas import tpu as pltpu

# ---- model config (small, consistent with the module's forward) -------------
B, S = 2, 8          # batch, sequence length
VOCAB = 64
H = 32               # hidden size
N_HEADS = 2
D_HEAD = H // N_HEADS
MLP = 64
N_LAYERS = 2
LN_EPS = 1e-5
M = B * S            # flattened tokens

_VMEM = pl.BlockSpec(memory_space=pltpu.MemorySpace.VMEM)


def _layernorm(x, g, b):
    mu = jnp.mean(x, axis=-1, keepdims=True)
    var = jnp.mean(jnp.square(x - mu), axis=-1, keepdims=True)
    return (x - mu) * jax.lax.rsqrt(var + LN_EPS) * g + b


# ---- single fused Pallas kernel: all layers + reward head + BCE loss --------
def fused_reward_kernel(x_ref, bias_ref,
                        ln1g_ref, ln1b_ref, wqkv_ref, bqkv_ref,
                        wo_ref, bo_ref, ln2g_ref, ln2b_ref,
                        w1_ref, b1_ref, w2_ref, b2_ref,
                        lnfg_ref, lnfb_ref, wcls_ref, bcls_ref,
                        labels_ref,
                        logits_ref, loss_ref):
    x = x_ref[...].astype(jnp.float32)            # (M, H) lane-dense activation slab
    attn_bias = bias_ref[...]                     # (M, M): 0 where allowed, -1e30 masked
    scale = jnp.float32(1.0 / math.sqrt(D_HEAD))

    for l in range(N_LAYERS):                     # static unroll; weights stay in VMEM
        # ---------------- attention block (pre-LN) ----------------
        h = _layernorm(x, ln1g_ref[l], ln1b_ref[l])          # (M, H) f32
        hb = h.astype(jnp.bfloat16)

        # Fused QKV projection: ONE MXU contraction over H producing all
        # components and heads at once: (3*nH*D, H) x (M, H)^T -> (3*nH*D, M).
        qkv_t = jax.lax.dot_general(
            wqkv_ref[l], hb, (((1,), (1,)), ((), ())),
            preferred_element_type=jnp.float32) + bqkv_ref[l]
        # (3*nH, M, D): leading-dim split + minor-dims swap (no lane slicing).
        qkv = jnp.swapaxes(qkv_t.reshape(3 * N_HEADS, D_HEAD, M), 1, 2)
        q = (qkv[:N_HEADS] * scale).astype(jnp.bfloat16)     # (nH, M, D)
        k = qkv[N_HEADS:2 * N_HEADS].astype(jnp.bfloat16)
        v = qkv[2 * N_HEADS:].astype(jnp.bfloat16)

        # head-batched attention (flash-style einsum forms)
        s = jnp.einsum('nqd,nkd->nqk', q, k,
                       preferred_element_type=jnp.float32)   # (nH, M, M)
        s = s + attn_bias[None]                              # causal + padding, hoisted
        s = s - jnp.max(s, axis=-1, keepdims=True)
        p = jnp.exp(s)
        p = p * pl.reciprocal(jnp.sum(p, axis=-1, keepdims=True), approx=True)
        o = jnp.einsum('nqk,nkd->nqd', p.astype(jnp.bfloat16), v,
                       preferred_element_type=jnp.float32)   # (nH, M, D)

        # output projection with the head merge folded into the contraction
        proj = jnp.einsum('nqd,ndh->nqh', o.astype(jnp.bfloat16), wo_ref[l],
                          preferred_element_type=jnp.float32)  # (nH, M, H)
        x = x + jnp.sum(proj, axis=0) + bo_ref[l]

        # ---------------- MLP block (pre-LN, GPT-2 tanh GELU) ----------------
        h2 = _layernorm(x, ln2g_ref[l], ln2b_ref[l])
        m1 = jnp.dot(h2.astype(jnp.bfloat16), w1_ref[l],
                     preferred_element_type=jnp.float32) + b1_ref[l]   # (M, MLP)
        g = 0.5 * m1 * (1.0 + jnp.tanh(0.7978845608028654 *
                                       (m1 + 0.044715 * m1 * m1 * m1)))
        x = x + jnp.dot(g.astype(jnp.bfloat16), w2_ref[l],
                        preferred_element_type=jnp.float32) + b2_ref[l]

    # ---- reward head: final LN of token 0 only, VPU classifier, BCE loss ----
    h0 = x.reshape(B, S, H)[:, 0, :]              # hidden_states[-1][:, 0, :]  (B, H)
    hf = _layernorm(h0, lnfg_ref[...], lnfb_ref[...])
    # Linear(H, 1) as a VPU multiply-reduce (avoids an N=1 MXU pass).
    z = jnp.sum(hf * wcls_ref[...], axis=-1, keepdims=True) + bcls_ref[...]   # (B, 1)
    logits_ref[...] = z

    # BCEWithLogitsLoss (mean reduction), numerically-stable form
    y = labels_ref[...]                           # (B, 1)
    per = jnp.maximum(z, 0.0) - z * y + jnp.log(1.0 + jnp.exp(-jnp.abs(z)))
    loss_ref[...] = jnp.mean(per, axis=(0, 1), keepdims=True)


# ---- wrapper ----------------------------------------------------------------
def run_reward_model(x2d, attn_bias, params, labels_2d):
    args = (x2d, attn_bias,
            params['ln1_g'], params['ln1_b'], params['w_qkv'], params['b_qkv'],
            params['w_o'], params['b_o'], params['ln2_g'], params['ln2_b'],
            params['w1'], params['b1'], params['w2'], params['b2'],
            params['lnf_g'], params['lnf_b'], params['w_cls'], params['b_cls'],
            labels_2d)
    logits, loss = pl.pallas_call(
        fused_reward_kernel,
        out_shape=(jax.ShapeDtypeStruct((B, 1), jnp.float32),
                   jax.ShapeDtypeStruct((1, 1), jnp.float32)),
        in_specs=[_VMEM] * len(args),
        out_specs=(_VMEM, _VMEM),
    )(*args)
    return logits, loss


def init_params(key):
    ks = jax.random.split(key, 3 + N_LAYERS)
    params = {
        'wte': 0.02 * jax.random.normal(ks[0], (VOCAB, H), jnp.float32),
        'wpe': 0.02 * jax.random.normal(ks[1], (S, H), jnp.float32),
        'lnf_g': jnp.ones((1, H), jnp.float32),
        'lnf_b': jnp.zeros((1, H), jnp.float32),
        # classifier Linear(H, 1) stored as a (1, H) row for the VPU reduce
        'w_cls': (0.02 * jax.random.normal(ks[2], (H, 1), jnp.float32)).T,
        'b_cls': jnp.zeros((1, 1), jnp.float32),
    }
    ln1_g, ln1_b, wqkv, bqkv, wo, bo = [], [], [], [], [], []
    ln2_g, ln2_b, w1, b1, w2, b2 = [], [], [], [], [], []
    for l in range(N_LAYERS):
        lk = jax.random.split(ks[3 + l], 4)
        w_qkv_hd = 0.02 * jax.random.normal(lk[0], (H, 3 * H), jnp.float32)
        w_o_hh = 0.02 * jax.random.normal(lk[1], (H, H), jnp.float32)
        w_mlp1 = 0.02 * jax.random.normal(lk[2], (H, MLP), jnp.float32)
        w_mlp2 = 0.02 * jax.random.normal(lk[3], (MLP, H), jnp.float32)

        ln1_g.append(jnp.ones((1, H), jnp.float32))
        ln1_b.append(jnp.zeros((1, H), jnp.float32))
        # QKV weight transposed to (3*nH*D_HEAD, H): row order (component, head, d)
        # so a single MXU pass yields q/k/v for every head without lane slicing.
        wqkv.append(w_qkv_hd.T)
        bqkv.append(jnp.zeros((3 * H, 1), jnp.float32))
        # output projection reshaped to (nH, D, H): the head merge happens inside
        # the head-batched contraction in the kernel.
        wo.append(w_o_hh.reshape(N_HEADS, D_HEAD, H))
        bo.append(jnp.zeros((1, H), jnp.float32))
        ln2_g.append(jnp.ones((1, H), jnp.float32))
        ln2_b.append(jnp.zeros((1, H), jnp.float32))
        w1.append(w_mlp1)
        b1.append(jnp.zeros((1, MLP), jnp.float32))
        w2.append(w_mlp2)
        b2.append(jnp.zeros((1, H), jnp.float32))

    stack_f32 = lambda xs: jnp.stack(xs, axis=0)
    stack_bf16 = lambda xs: jnp.stack(xs, axis=0).astype(jnp.bfloat16)  # MXU-only operands
    params.update({
        'ln1_g': stack_f32(ln1_g), 'ln1_b': stack_f32(ln1_b),
        'w_qkv': stack_bf16(wqkv), 'b_qkv': stack_f32(bqkv),
        'w_o': stack_bf16(wo),     'b_o': stack_f32(bo),
        'ln2_g': stack_f32(ln2_g), 'ln2_b': stack_f32(ln2_b),
        'w1': stack_bf16(w1),      'b1': stack_f32(b1),
        'w2': stack_bf16(w2),      'b2': stack_f32(b2),
    })
    return params


@jax.jit
def reward_model_forward(params, input_ids, attention_mask, labels=None):
    assert input_ids.shape == (B, S)
    # glue: embedding lookup + positional embedding (gather stays in plain JAX)
    x = params['wte'][input_ids] + params['wpe'][None, :, :]          # (B, S, H)
    x2d = x.reshape(M, H)                                             # lane-dense slab

    # additive attention bias (block-diagonal per sequence, causal, key padding),
    # built ONCE per call and shared by every fused layer.
    tok = jnp.arange(M)
    bid, pos = tok // S, tok % S
    key_ok = attention_mask.reshape(-1) > 0
    allow = ((bid[:, None] == bid[None, :]) &
             (pos[None, :] <= pos[:, None]) &
             key_ok[None, :])
    attn_bias = jnp.where(allow, 0.0, -1e30).astype(jnp.float32)      # (M, M)

    lbl = (labels if labels is not None else jnp.zeros((B,), jnp.float32))
    lbl2d = lbl.astype(jnp.float32).reshape(B, 1)

    logits2d, loss2d = run_reward_model(x2d, attn_bias, params, lbl2d)
    logits = logits2d[:, 0]                      # .squeeze(-1)
    if labels is not None:
        return loss2d[0, 0], logits              # (loss, logits)
    return logits


if __name__ == "__main__":
    key = jax.random.PRNGKey(0)
    pkey, ikey, lkey = jax.random.split(key, 3)
    params = init_params(pkey)

    input_ids = jax.random.randint(ikey, (B, S), 0, VOCAB)
    attention_mask = jnp.ones((B, S), jnp.int32).at[:, 6:].set(0)   # pad last 2 tokens
    labels = jax.random.bernoulli(lkey, 0.5, (B,)).astype(jnp.float32)

    loss, logits = reward_model_forward(params, input_ids, attention_mask, labels)
    logits_only = reward_model_forward(params, input_ids, attention_mask)

    jax.block_until_ready((loss, logits, logits_only))
    print("KERNEL_OK")
</pallas_src>

<mosaic_0001>
module attributes {stable_mosaic.version = 11 : i64} {
  func.func @fused_reward_kernel(%arg0: memref<16x32xf32, #tpu.memory_space<vmem>>, %arg1: memref<16x16xf32, #tpu.memory_space<vmem>>, %arg2: memref<2x1x32xf32, #tpu.memory_space<vmem>>, %arg3: memref<2x1x32xf32, #tpu.memory_space<vmem>>, %arg4: memref<2x96x32xbf16, #tpu.memory_space<vmem>>, %arg5: memref<2x96x1xf32, #tpu.memory_space<vmem>>, %arg6: memref<2x2x16x32xbf16, #tpu.memory_space<vmem>>, %arg7: memref<2x1x32xf32, #tpu.memory_space<vmem>>, %arg8: memref<2x1x32xf32, #tpu.memory_space<vmem>>, %arg9: memref<2x1x32xf32, #tpu.memory_space<vmem>>, %arg10: memref<2x32x64xbf16, #tpu.memory_space<vmem>>, %arg11: memref<2x1x64xf32, #tpu.memory_space<vmem>>, %arg12: memref<2x64x32xbf16, #tpu.memory_space<vmem>>, %arg13: memref<2x1x32xf32, #tpu.memory_space<vmem>>, %arg14: memref<1x32xf32, #tpu.memory_space<vmem>>, %arg15: memref<1x32xf32, #tpu.memory_space<vmem>>, %arg16: memref<1x32xf32, #tpu.memory_space<vmem>>, %arg17: memref<1x1xf32, #tpu.memory_space<vmem>>, %arg18: memref<2x1xf32, #tpu.memory_space<vmem>>, %arg19: memref<2x1xf32, #tpu.memory_space<vmem>>, %arg20: memref<1x1xf32, #tpu.memory_space<vmem>>) attributes {dimension_semantics = [], scalar_prefetch = 0 : i64, scratch_operands = 0 : i64, tpu.core_type = #tpu.core_type<tc>} {
    %c0 = arith.constant 0 : index
    %c0_0 = arith.constant 0 : index
    %0 = vector.load %arg0[%c0, %c0_0] : memref<16x32xf32, #tpu.memory_space<vmem>>, vector<16x32xf32>
    %c0_1 = arith.constant 0 : index
    %c0_2 = arith.constant 0 : index
    %1 = vector.load %arg1[%c0_1, %c0_2] : memref<16x16xf32, #tpu.memory_space<vmem>>, vector<16x16xf32>
    %c0_3 = arith.constant 0 : index
    %c0_4 = arith.constant 0 : index
    %c0_5 = arith.constant 0 : index
    %2 = vector.load %arg2[%c0_3, %c0_4, %c0_5] : memref<2x1x32xf32, #tpu.memory_space<vmem>>, vector<1x1x32xf32>
    %3 = vector.shape_cast %2 : vector<1x1x32xf32> to vector<1x32xf32>
    %c0_6 = arith.constant 0 : index
    %c0_7 = arith.constant 0 : index
    %c0_8 = arith.constant 0 : index
    %4 = vector.load %arg3[%c0_6, %c0_7, %c0_8] : memref<2x1x32xf32, #tpu.memory_space<vmem>>, vector<1x1x32xf32>
    %5 = vector.shape_cast %4 : vector<1x1x32xf32> to vector<1x32xf32>
    %cst = arith.constant dense<0.000000e+00> : vector<16xf32>
    %6 = vector.multi_reduction <add>, %0, %cst [1] : vector<16x32xf32> to vector<16xf32>
    %7 = vector.shape_cast %6 : vector<16xf32> to vector<16x1xf32>
    %cst_9 = arith.constant 3.200000e+01 : f32
    %8 = vector.broadcast %cst_9 : f32 to vector<16x1xf32>
    %9 = arith.divf %7, %8 : vector<16x1xf32>
    %10 = vector.broadcast %9 : vector<16x1xf32> to vector<16x32xf32>
    %11 = arith.subf %0, %10 : vector<16x32xf32>
    %12 = arith.mulf %11, %11 : vector<16x32xf32>
    %cst_10 = arith.constant dense<0.000000e+00> : vector<16xf32>
    %13 = vector.multi_reduction <add>, %12, %cst_10 [1] : vector<16x32xf32> to vector<16xf32>
    %14 = vector.shape_cast %13 : vector<16xf32> to vector<16x1xf32>
    %cst_11 = arith.constant 3.200000e+01 : f32
    %15 = vector.broadcast %cst_11 : f32 to vector<16x1xf32>
    %16 = arith.divf %14, %15 : vector<16x1xf32>
    %17 = vector.broadcast %9 : vector<16x1xf32> to vector<16x32xf32>
    %18 = arith.subf %0, %17 : vector<16x32xf32>
    %cst_12 = arith.constant 9.99999974E-6 : f32
    %19 = vector.broadcast %cst_12 : f32 to vector<16x1xf32>
    %20 = arith.addf %16, %19 : vector<16x1xf32>
    %21 = math.rsqrt %20 : vector<16x1xf32>
    %22 = vector.broadcast %21 : vector<16x1xf32> to vector<16x32xf32>
    %23 = arith.mulf %18, %22 : vector<16x32xf32>
    %24 = vector.broadcast %3 : vector<1x32xf32> to vector<16x32xf32>
    %25 = arith.mulf %23, %24 : vector<16x32xf32>
    %26 = vector.broadcast %5 : vector<1x32xf32> to vector<16x32xf32>
    %27 = arith.addf %25, %26 : vector<16x32xf32>
    %28 = arith.truncf %27 : vector<16x32xf32> to vector<16x32xbf16>
    %c0_13 = arith.constant 0 : index
    %c0_14 = arith.constant 0 : index
    %c0_15 = arith.constant 0 : index
    %29 = vector.load %arg4[%c0_13, %c0_14, %c0_15] : memref<2x96x32xbf16, #tpu.memory_space<vmem>>, vector<1x96x32xbf16>
    %30 = vector.shape_cast %29 : vector<1x96x32xbf16> to vector<96x32xbf16>
    %cst_16 = arith.constant dense<0.000000e+00> : vector<96x16xf32>
    %31 = tpu.matmul %30, %28, %cst_16 {dimension_numbers = #tpu.dot_dimension_numbers<[1], [1], [0], [0], [0, 0, 1, 0], [], []>} : vector<96x32xbf16>, vector<16x32xbf16>, vector<96x16xf32> -> vector<96x16xf32>
    %c0_17 = arith.constant 0 : index
    %c0_18 = arith.constant 0 : index
    %c0_19 = arith.constant 0 : index
    %32 = vector.load %arg5[%c0_17, %c0_18, %c0_19] : memref<2x96x1xf32, #tpu.memory_space<vmem>>, vector<1x96x1xf32>
    %33 = vector.shape_cast %32 : vector<1x96x1xf32> to vector<96x1xf32>
    %34 = vector.broadcast %33 : vector<96x1xf32> to vector<96x16xf32>
    %35 = arith.addf %31, %34 : vector<96x16xf32>
    %36 = vector.shape_cast %35 : vector<96x16xf32> to vector<6x16x16xf32>
    %37 = tpu.transpose %36, [0, 2, 1] : vector<6x16x16xf32> -> vector<6x16x16xf32>
    %38 = vector.extract_strided_slice %37 {offsets = [0, 0, 0], sizes = [2, 16, 16], strides = [1, 1, 1]} : vector<6x16x16xf32> to vector<2x16x16xf32>
    %cst_20 = arith.constant 2.500000e-01 : f32
    %39 = vector.broadcast %cst_20 : f32 to vector<2x16x16xf32>
    %40 = arith.mulf %38, %39 : vector<2x16x16xf32>
    %41 = arith.truncf %40 : vector<2x16x16xf32> to vector<2x16x16xbf16>
    %42 = vector.extract_strided_slice %37 {offsets = [2, 0, 0], sizes = [2, 16, 16], strides = [1, 1, 1]} : vector<6x16x16xf32> to vector<2x16x16xf32>
    %43 = arith.truncf %42 : vector<2x16x16xf32> to vector<2x16x16xbf16>
    %44 = vector.extract_strided_slice %37 {offsets = [4, 0, 0], sizes = [2, 16, 16], strides = [1, 1, 1]} : vector<6x16x16xf32> to vector<2x16x16xf32>
    %45 = arith.truncf %44 : vector<2x16x16xf32> to vector<2x16x16xbf16>
    "tpu.trace_start"() <{level = 10 : i32, message = "nqd,nkd->nqk"}> : () -> ()
    %cst_21 = arith.constant dense<0.000000e+00> : vector<2x16x16xf32>
    %46 = tpu.matmul %41, %43, %cst_21 {dimension_numbers = #tpu.dot_dimension_numbers<[2], [2], [1], [1], [0, 0, 0, 1, 1, 1], [0], [0]>} : vector<2x16x16xbf16>, vector<2x16x16xbf16>, vector<2x16x16xf32> -> vector<2x16x16xf32>
    "tpu.trace_stop"() : () -> ()
    %47 = vector.shape_cast %1 : vector<16x16xf32> to vector<1x16x16xf32>
    %48 = vector.broadcast %47 : vector<1x16x16xf32> to vector<2x16x16xf32>
    %49 = arith.addf %46, %48 : vector<2x16x16xf32>
    %cst_22 = arith.constant dense<0xFF800000> : vector<2x16xf32>
    %50 = vector.multi_reduction <maximumf>, %49, %cst_22 [2] : vector<2x16x16xf32> to vector<2x16xf32>
    %51 = vector.shape_cast %50 : vector<2x16xf32> to vector<2x16x1xf32>
    %52 = vector.broadcast %51 : vector<2x16x1xf32> to vector<2x16x16xf32>
    %53 = arith.subf %49, %52 : vector<2x16x16xf32>
    %54 = math.exp %53 : vector<2x16x16xf32>
    %cst_23 = arith.constant dense<0.000000e+00> : vector<2x16xf32>
    %55 = vector.multi_reduction <add>, %54, %cst_23 [2] : vector<2x16x16xf32> to vector<2x16xf32>
    %56 = vector.shape_cast %55 : vector<2x16xf32> to vector<2x16x1xf32>
    %57 = tpu.reciprocal %56 {approx = true} : vector<2x16x1xf32> -> vector<2x16x1xf32>
    %58 = vector.broadcast %57 : vector<2x16x1xf32> to vector<2x16x16xf32>
    %59 = arith.mulf %54, %58 : vector<2x16x16xf32>
    %60 = arith.truncf %59 : vector<2x16x16xf32> to vector<2x16x16xbf16>
    "tpu.trace_start"() <{level = 10 : i32, message = "nqk,nkd->nqd"}> : () -> ()
    %cst_24 = arith.constant dense<0.000000e+00> : vector<2x16x16xf32>
    %61 = tpu.matmul %60, %45, %cst_24 {dimension_numbers = #tpu.dot_dimension_numbers<[2], [1], [1], [2], [0, 0, 0, 1, 1, 2], [0], [0]>} : vector<2x16x16xbf16>, vector<2x16x16xbf16>, vector<2x16x16xf32> -> vector<2x16x16xf32>
    "tpu.trace_stop"() : () -> ()
    %62 = arith.truncf %61 : vector<2x16x16xf32> to vector<2x16x16xbf16>
    %c0_25 = arith.constant 0 : index
    %c0_26 = arith.constant 0 : index
    %c0_27 = arith.constant 0 : index
    %c0_28 = arith.constant 0 : index
    %63 = vector.load %arg6[%c0_25, %c0_26, %c0_27, %c0_28] : memref<2x2x16x32xbf16, #tpu.memory_space<vmem>>, vector<1x2x16x32xbf16>
    %64 = vector.shape_cast %63 : vector<1x2x16x32xbf16> to vector<2x16x32xbf16>
    "tpu.trace_start"() <{level = 10 : i32, message = "nqd,ndh->nqh"}> : () -> ()
    %cst_29 = arith.constant dense<0.000000e+00> : vector<2x16x32xf32>
    %65 = tpu.matmul %62, %64, %cst_29 {dimension_numbers = #tpu.dot_dimension_numbers<[2], [1], [1], [2], [0, 0, 0, 1, 1, 2], [0], [0]>} : vector<2x16x16xbf16>, vector<2x16x32xbf16>, vector<2x16x32xf32> -> vector<2x16x32xf32>
    "tpu.trace_stop"() : () -> ()
    %cst_30 = arith.constant dense<0.000000e+00> : vector<16x32xf32>
    %66 = vector.multi_reduction <add>, %65, %cst_30 [0] : vector<2x16x32xf32> to vector<16x32xf32>
    %67 = arith.addf %0, %66 : vector<16x32xf32>
    %c0_31 = arith.constant 0 : index
    %c0_32 = arith.constant 0 : index
    %c0_33 = arith.constant 0 : index
    %68 = vector.load %arg7[%c0_31, %c0_32, %c0_33] : memref<2x1x32xf32, #tpu.memory_space<vmem>>, vector<1x1x32xf32>
    %69 = vector.shape_cast %68 : vector<1x1x32xf32> to vector<1x32xf32>
    %70 = vector.broadcast %69 : vector<1x32xf32> to vector<16x32xf32>
    %71 = arith.addf %67, %70 : vector<16x32xf32>
    %c0_34 = arith.constant 0 : index
    %c0_35 = arith.constant 0 : index
    %c0_36 = arith.constant 0 : index
    %72 = vector.load %arg8[%c0_34, %c0_35, %c0_36] : memref<2x1x32xf32, #tpu.memory_space<vmem>>, vector<1x1x32xf32>
    %73 = vector.shape_cast %72 : vector<1x1x32xf32> to vector<1x32xf32>
    %c0_37 = arith.constant 0 : index
    %c0_38 = arith.constant 0 : index
    %c0_39 = arith.constant 0 : index
    %74 = vector.load %arg9[%c0_37, %c0_38, %c0_39] : memref<2x1x32xf32, #tpu.memory_space<vmem>>, vector<1x1x32xf32>
    %75 = vector.shape_cast %74 : vector<1x1x32xf32> to vector<1x32xf32>
    %cst_40 = arith.constant dense<0.000000e+00> : vector<16xf32>
    %76 = vector.multi_reduction <add>, %71, %cst_40 [1] : vector<16x32xf32> to vector<16xf32>
    %77 = vector.shape_cast %76 : vector<16xf32> to vector<16x1xf32>
    %cst_41 = arith.constant 3.200000e+01 : f32
    %78 = vector.broadcast %cst_41 : f32 to vector<16x1xf32>
    %79 = arith.divf %77, %78 : vector<16x1xf32>
    %80 = vector.broadcast %79 : vector<16x1xf32> to vector<16x32xf32>
    %81 = arith.subf %71, %80 : vector<16x32xf32>
    %82 = arith.mulf %81, %81 : vector<16x32xf32>
    %cst_42 = arith.constant dense<0.000000e+00> : vector<16xf32>
    %83 = vector.multi_reduction <add>, %82, %cst_42 [1] : vector<16x32xf32> to vector<16xf32>
    %84 = vector.shape_cast %83 : vector<16xf32> to vector<16x1xf32>
    %cst_43 = arith.constant 3.200000e+01 : f32
    %85 = vector.broadcast %cst_43 : f32 to vector<16x1xf32>
    %86 = arith.divf %84, %85 : vector<16x1xf32>
    %87 = vector.broadcast %79 : vector<16x1xf32> to vector<16x32xf32>
    %88 = arith.subf %71, %87 : vector<16x32xf32>
    %cst_44 = arith.constant 9.99999974E-6 : f32
    %89 = vector.broadcast %cst_44 : f32 to vector<16x1xf32>
    %90 = arith.addf %86, %89 : vector<16x1xf32>
    %91 = math.rsqrt %90 : vector<16x1xf32>
    %92 = vector.broadcast %91 : vector<16x1xf32> to vector<16x32xf32>
    %93 = arith.mulf %88, %92 : vector<16x32xf32>
    %94 = vector.broadcast %73 : vector<1x32xf32> to vector<16x32xf32>
    %95 = arith.mulf %93, %94 : vector<16x32xf32>
    %96 = vector.broadcast %75 : vector<1x32xf32> to vector<16x32xf32>
    %97 = arith.addf %95, %96 : vector<16x32xf32>
    %98 = arith.truncf %97 : vector<16x32xf32> to vector<16x32xbf16>
    %c0_45 = arith.constant 0 : index
    %c0_46 = arith.constant 0 : index
    %c0_47 = arith.constant 0 : index
    %99 = vector.load %arg10[%c0_45, %c0_46, %c0_47] : memref<2x32x64xbf16, #tpu.memory_space<vmem>>, vector<1x32x64xbf16>
    %100 = vector.shape_cast %99 : vector<1x32x64xbf16> to vector<32x64xbf16>
    %cst_48 = arith.constant dense<0.000000e+00> : vector<16x64xf32>
    %101 = tpu.matmul %98, %100, %cst_48 {dimension_numbers = #tpu.dot_dimension_numbers<[1], [0], [0], [1], [0, 0, 1, 1], [], []>} : vector<16x32xbf16>, vector<32x64xbf16>, vector<16x64xf32> -> vector<16x64xf32>
    %c0_49 = arith.constant 0 : index
    %c0_50 = arith.constant 0 : index
    %c0_51 = arith.constant 0 : index
    %102 = vector.load %arg11[%c0_49, %c0_50, %c0_51] : memref<2x1x64xf32, #tpu.memory_space<vmem>>, vector<1x1x64xf32>
    %103 = vector.shape_cast %102 : vector<1x1x64xf32> to vector<1x64xf32>
    %104 = vector.broadcast %103 : vector<1x64xf32> to vector<16x64xf32>
    %105 = arith.addf %101, %104 : vector<16x64xf32>
    %cst_52 = arith.constant 5.000000e-01 : f32
    %106 = vector.broadcast %cst_52 : f32 to vector<16x64xf32>
    %107 = arith.mulf %106, %105 : vector<16x64xf32>
    %cst_53 = arith.constant 4.471500e-02 : f32
    %108 = vector.broadcast %cst_53 : f32 to vector<16x64xf32>
    %109 = arith.mulf %108, %105 : vector<16x64xf32>
    %110 = arith.mulf %109, %105 : vector<16x64xf32>
    %111 = arith.mulf %110, %105 : vector<16x64xf32>
    %112 = arith.addf %105, %111 : vector<16x64xf32>
    %cst_54 = arith.constant 0.797884583 : f32
    %113 = vector.broadcast %cst_54 : f32 to vector<16x64xf32>
    %114 = arith.mulf %113, %112 : vector<16x64xf32>
    %115 = math.tanh %114 : vector<16x64xf32>
    %cst_55 = arith.constant 1.000000e+00 : f32
    %116 = vector.broadcast %cst_55 : f32 to vector<16x64xf32>
    %117 = arith.addf %116, %115 : vector<16x64xf32>
    %118 = arith.mulf %107, %117 : vector<16x64xf32>
    %119 = arith.truncf %118 : vector<16x64xf32> to vector<16x64xbf16>
    %c0_56 = arith.constant 0 : index
    %c0_57 = arith.constant 0 : index
    %c0_58 = arith.constant 0 : index
    %120 = vector.load %arg12[%c0_56, %c0_57, %c0_58] : memref<2x64x32xbf16, #tpu.memory_space<vmem>>, vector<1x64x32xbf16>
    %121 = vector.shape_cast %120 : vector<1x64x32xbf16> to vector<64x32xbf16>
    %cst_59 = arith.constant dense<0.000000e+00> : vector<16x32xf32>
    %122 = tpu.matmul %119, %121, %cst_59 {dimension_numbers = #tpu.dot_dimension_numbers<[1], [0], [0], [1], [0, 0, 1, 1], [], []>} : vector<16x64xbf16>, vector<64x32xbf16>, vector<16x32xf32> -> vector<16x32xf32>
    %123 = arith.addf %71, %122 : vector<16x32xf32>
    %c0_60 = arith.constant 0 : index
    %c0_61 = arith.constant 0 : index
    %c0_62 = arith.constant 0 : index
    %124 = vector.load %arg13[%c0_60, %c0_61, %c0_62] : memref<2x1x32xf32, #tpu.memory_space<vmem>>, vector<1x1x32xf32>
    %125 = vector.shape_cast %124 : vector<1x1x32xf32> to vector<1x32xf32>
    %126 = vector.broadcast %125 : vector<1x32xf32> to vector<16x32xf32>
    %127 = arith.addf %123, %126 : vector<16x32xf32>
    %c1 = arith.constant 1 : index
    %c0_63 = arith.constant 0 : index
    %c0_64 = arith.constant 0 : index
    %128 = vector.load %arg2[%c1, %c0_63, %c0_64] : memref<2x1x32xf32, #tpu.memory_space<vmem>>, vector<1x1x32xf32>
    %129 = vector.shape_cast %128 : vector<1x1x32xf32> to vector<1x32xf32>
    %c1_65 = arith.constant 1 : index
    %c0_66 = arith.constant 0 : index
    %c0_67 = arith.constant 0 : index
    %130 = vector.load %arg3[%c1_65, %c0_66, %c0_67] : memref<2x1x32xf32, #tpu.memory_space<vmem>>, vector<1x1x32xf32>
    %131 = vector.shape_cast %130 : vector<1x1x32xf32> to vector<1x32xf32>
    %cst_68 = arith.constant dense<0.000000e+00> : vector<16xf32>
    %132 = vector.multi_reduction <add>, %127, %cst_68 [1] : vector<16x32xf32> to vector<16xf32>
    %133 = vector.shape_cast %132 : vector<16xf32> to vector<16x1xf32>
    %cst_69 = arith.constant 3.200000e+01 : f32
    %134 = vector.broadcast %cst_69 : f32 to vector<16x1xf32>
    %135 = arith.divf %133, %134 : vector<16x1xf32>
    %136 = vector.broadcast %135 : vector<16x1xf32> to vector<16x32xf32>
    %137 = arith.subf %127, %136 : vector<16x32xf32>
    %138 = arith.mulf %137, %137 : vector<16x32xf32>
    %cst_70 = arith.constant dense<0.000000e+00> : vector<16xf32>
    %139 = vector.multi_reduction <add>, %138, %cst_70 [1] : vector<16x32xf32> to vector<16xf32>
    %140 = vector.shape_cast %139 : vector<16xf32> to vector<16x1xf32>
    %cst_71 = arith.constant 3.200000e+01 : f32
    %141 = vector.broadcast %cst_71 : f32 to vector<16x1xf32>
    %142 = arith.divf %140, %141 : vector<16x1xf32>
    %143 = vector.broadcast %135 : vector<16x1xf32> to vector<16x32xf32>
    %144 = arith.subf %127, %143 : vector<16x32xf32>
    %cst_72 = arith.constant 9.99999974E-6 : f32
    %145 = vector.broadcast %cst_72 : f32 to vector<16x1xf32>
    %146 = arith.addf %142, %145 : vector<16x1xf32>
    %147 = math.rsqrt %146 : vector<16x1xf32>
    %148 = vector.broadcast %147 : vector<16x1xf32> to vector<16x32xf32>
    %149 = arith.mulf %144, %148 : vector<16x32xf32>
    %150 = vector.broadcast %129 : vector<1x32xf32> to vector<16x32xf32>
    %151 = arith.mulf %149, %150 : vector<16x32xf32>
    %152 = vector.broadcast %131 : vector<1x32xf32> to vector<16x32xf32>
    %153 = arith.addf %151, %152 : vector<16x32xf32>
    %154 = arith.truncf %153 : vector<16x32xf32> to vector<16x32xbf16>
    %c1_73 = arith.constant 1 : index
    %c0_74 = arith.constant 0 : index
    %c0_75 = arith.constant 0 : index
    %155 = vector.load %arg4[%c1_73, %c0_74, %c0_75] : memref<2x96x32xbf16, #tpu.memory_space<vmem>>, vector<1x96x32xbf16>
    %156 = vector.shape_cast %155 : vector<1x96x32xbf16> to vector<96x32xbf16>
    %cst_76 = arith.constant dense<0.000000e+00> : vector<96x16xf32>
    %157 = tpu.matmul %156, %154, %cst_76 {dimension_numbers = #tpu.dot_dimension_numbers<[1], [1], [0], [0], [0, 0, 1, 0], [], []>} : vector<96x32xbf16>, vector<16x32xbf16>, vector<96x16xf32> -> vector<96x16xf32>
    %c1_77 = arith.constant 1 : index
    %c0_78 = arith.constant 0 : index
    %c0_79 = arith.constant 0 : index
    %158 = vector.load %arg5[%c1_77, %c0_78, %c0_79] : memref<2x96x1xf32, #tpu.memory_space<vmem>>, vector<1x96x1xf32>
    %159 = vector.shape_cast %158 : vector<1x96x1xf32> to vector<96x1xf32>
    %160 = vector.broadcast %159 : vector<96x1xf32> to vector<96x16xf32>
    %161 = arith.addf %157, %160 : vector<96x16xf32>
    %162 = vector.shape_cast %161 : vector<96x16xf32> to vector<6x16x16xf32>
    %163 = tpu.transpose %162, [0, 2, 1] : vector<6x16x16xf32> -> vector<6x16x16xf32>
    %164 = vector.extract_strided_slice %163 {offsets = [0, 0, 0], sizes = [2, 16, 16], strides = [1, 1, 1]} : vector<6x16x16xf32> to vector<2x16x16xf32>
    %cst_80 = arith.constant 2.500000e-01 : f32
    %165 = vector.broadcast %cst_80 : f32 to vector<2x16x16xf32>
    %166 = arith.mulf %164, %165 : vector<2x16x16xf32>
    %167 = arith.truncf %166 : vector<2x16x16xf32> to vector<2x16x16xbf16>
    %168 = vector.extract_strided_slice %163 {offsets = [2, 0, 0], sizes = [2, 16, 16], strides = [1, 1, 1]} : vector<6x16x16xf32> to vector<2x16x16xf32>
    %169 = arith.truncf %168 : vector<2x16x16xf32> to vector<2x16x16xbf16>
    %170 = vector.extract_strided_slice %163 {offsets = [4, 0, 0], sizes = [2, 16, 16], strides = [1, 1, 1]} : vector<6x16x16xf32> to vector<2x16x16xf32>
    %171 = arith.truncf %170 : vector<2x16x16xf32> to vector<2x16x16xbf16>
    "tpu.trace_start"() <{level = 10 : i32, message = "nqd,nkd->nqk"}> : () -> ()
    %cst_81 = arith.constant dense<0.000000e+00> : vector<2x16x16xf32>
    %172 = tpu.matmul %167, %169, %cst_81 {dimension_numbers = #tpu.dot_dimension_numbers<[2], [2], [1], [1], [0, 0, 0, 1, 1, 1], [0], [0]>} : vector<2x16x16xbf16>, vector<2x16x16xbf16>, vector<2x16x16xf32> -> vector<2x16x16xf32>
    "tpu.trace_stop"() : () -> ()
    %173 = vector.shape_cast %1 : vector<16x16xf32> to vector<1x16x16xf32>
    %174 = vector.broadcast %173 : vector<1x16x16xf32> to vector<2x16x16xf32>
    %175 = arith.addf %172, %174 : vector<2x16x16xf32>
    %cst_82 = arith.constant dense<0xFF800000> : vector<2x16xf32>
    %176 = vector.multi_reduction <maximumf>, %175, %cst_82 [2] : vector<2x16x16xf32> to vector<2x16xf32>
    %177 = vector.shape_cast %176 : vector<2x16xf32> to vector<2x16x1xf32>
    %178 = vector.broadcast %177 : vector<2x16x1xf32> to vector<2x16x16xf32>
    %179 = arith.subf %175, %178 : vector<2x16x16xf32>
    %180 = math.exp %179 : vector<2x16x16xf32>
    %cst_83 = arith.constant dense<0.000000e+00> : vector<2x16xf32>
    %181 = vector.multi_reduction <add>, %180, %cst_83 [2] : vector<2x16x16xf32> to vector<2x16xf32>
    %182 = vector.shape_cast %181 : vector<2x16xf32> to vector<2x16x1xf32>
    %183 = tpu.reciprocal %182 {approx = true} : vector<2x16x1xf32> -> vector<2x16x1xf32>
    %184 = vector.broadcast %183 : vector<2x16x1xf32> to vector<2x16x16xf32>
    %185 = arith.mulf %180, %184 : vector<2x16x16xf32>
    %186 = arith.truncf %185 : vector<2x16x16xf32> to vector<2x16x16xbf16>
    "tpu.trace_start"() <{level = 10 : i32, message = "nqk,nkd->nqd"}> : () -> ()
    %cst_84 = arith.constant dense<0.000000e+00> : vector<2x16x16xf32>
    %187 = tpu.matmul %186, %171, %cst_84 {dimension_numbers = #tpu.dot_dimension_numbers<[2], [1], [1], [2], [0, 0, 0, 1, 1, 2], [0], [0]>} : vector<2x16x16xbf16>, vector<2x16x16xbf16>, vector<2x16x16xf32> -> vector<2x16x16xf32>
    "tpu.trace_stop"() : () -> ()
    %188 = arith.truncf %187 : vector<2x16x16xf32> to vector<2x16x16xbf16>
    %c1_85 = arith.constant 1 : index
    %c0_86 = arith.constant 0 : index
    %c0_87 = arith.constant 0 : index
    %c0_88 = arith.constant 0 : index
    %189 = vector.load %arg6[%c1_85, %c0_86, %c0_87, %c0_88] : memref<2x2x16x32xbf16, #tpu.memory_space<vmem>>, vector<1x2x16x32xbf16>
    %190 = vector.shape_cast %189 : vector<1x2x16x32xbf16> to vector<2x16x32xbf16>
    "tpu.trace_start"() <{level = 10 : i32, message = "nqd,ndh->nqh"}> : () -> ()
    %cst_89 = arith.constant dense<0.000000e+00> : vector<2x16x32xf32>
    %191 = tpu.matmul %188, %190, %cst_89 {dimension_numbers = #tpu.dot_dimension_numbers<[2], [1], [1], [2], [0, 0, 0, 1, 1, 2], [0], [0]>} : vector<2x16x16xbf16>, vector<2x16x32xbf16>, vector<2x16x32xf32> -> vector<2x16x32xf32>
    "tpu.trace_stop"() : () -> ()
    %cst_90 = arith.constant dense<0.000000e+00> : vector<16x32xf32>
    %192 = vector.multi_reduction <add>, %191, %cst_90 [0] : vector<2x16x32xf32> to vector<16x32xf32>
    %193 = arith.addf %127, %192 : vector<16x32xf32>
    %c1_91 = arith.constant 1 : index
    %c0_92 = arith.constant 0 : index
    %c0_93 = arith.constant 0 : index
    %194 = vector.load %arg7[%c1_91, %c0_92, %c0_93] : memref<2x1x32xf32, #tpu.memory_space<vmem>>, vector<1x1x32xf32>
    %195 = vector.shape_cast %194 : vector<1x1x32xf32> to vector<1x32xf32>
    %196 = vector.broadcast %195 : vector<1x32xf32> to vector<16x32xf32>
    %197 = arith.addf %193, %196 : vector<16x32xf32>
    %c1_94 = arith.constant 1 : index
    %c0_95 = arith.constant 0 : index
    %c0_96 = arith.constant 0 : index
    %198 = vector.load %arg8[%c1_94, %c0_95, %c0_96] : memref<2x1x32xf32, #tpu.memory_space<vmem>>, vector<1x1x32xf32>
    %199 = vector.shape_cast %198 : vector<1x1x32xf32> to vector<1x32xf32>
    %c1_97 = arith.constant 1 : index
    %c0_98 = arith.constant 0 : index
    %c0_99 = arith.constant 0 : index
    %200 = vector.load %arg9[%c1_97, %c0_98, %c0_99] : memref<2x1x32xf32, #tpu.memory_space<vmem>>, vector<1x1x32xf32>
    %201 = vector.shape_cast %200 : vector<1x1x32xf32> to vector<1x32xf32>
    %cst_100 = arith.constant dense<0.000000e+00> : vector<16xf32>
    %202 = vector.multi_reduction <add>, %197, %cst_100 [1] : vector<16x32xf32> to vector<16xf32>
    %203 = vector.shape_cast %202 : vector<16xf32> to vector<16x1xf32>
    %cst_101 = arith.constant 3.200000e+01 : f32
    %204 = vector.broadcast %cst_101 : f32 to vector<16x1xf32>
    %205 = arith.divf %203, %204 : vector<16x1xf32>
    %206 = vector.broadcast %205 : vector<16x1xf32> to vector<16x32xf32>
    %207 = arith.subf %197, %206 : vector<16x32xf32>
    %208 = arith.mulf %207, %207 : vector<16x32xf32>
    %cst_102 = arith.constant dense<0.000000e+00> : vector<16xf32>
    %209 = vector.multi_reduction <add>, %208, %cst_102 [1] : vector<16x32xf32> to vector<16xf32>
    %210 = vector.shape_cast %209 : vector<16xf32> to vector<16x1xf32>
    %cst_103 = arith.constant 3.200000e+01 : f32
    %211 = vector.broadcast %cst_103 : f32 to vector<16x1xf32>
    %212 = arith.divf %210, %211 : vector<16x1xf32>
    %213 = vector.broadcast %205 : vector<16x1xf32> to vector<16x32xf32>
    %214 = arith.subf %197, %213 : vector<16x32xf32>
    %cst_104 = arith.constant 9.99999974E-6 : f32
    %215 = vector.broadcast %cst_104 : f32 to vector<16x1xf32>
    %216 = arith.addf %212, %215 : vector<16x1xf32>
    %217 = math.rsqrt %216 : vector<16x1xf32>
    %218 = vector.broadcast %217 : vector<16x1xf32> to vector<16x32xf32>
    %219 = arith.mulf %214, %218 : vector<16x32xf32>
    %220 = vector.broadcast %199 : vector<1x32xf32> to vector<16x32xf32>
    %221 = arith.mulf %219, %220 : vector<16x32xf32>
    %222 = vector.broadcast %201 : vector<1x32xf32> to vector<16x32xf32>
    %223 = arith.addf %221, %222 : vector<16x32xf32>
    %224 = arith.truncf %223 : vector<16x32xf32> to vector<16x32xbf16>
    %c1_105 = arith.constant 1 : index
    %c0_106 = arith.constant 0 : index
    %c0_107 = arith.constant 0 : index
    %225 = vector.load %arg10[%c1_105, %c0_106, %c0_107] : memref<2x32x64xbf16, #tpu.memory_space<vmem>>, vector<1x32x64xbf16>
    %226 = vector.shape_cast %225 : vector<1x32x64xbf16> to vector<32x64xbf16>
    %cst_108 = arith.constant dense<0.000000e+00> : vector<16x64xf32>
    %227 = tpu.matmul %224, %226, %cst_108 {dimension_numbers = #tpu.dot_dimension_numbers<[1], [0], [0], [1], [0, 0, 1, 1], [], []>} : vector<16x32xbf16>, vector<32x64xbf16>, vector<16x64xf32> -> vector<16x64xf32>
    %c1_109 = arith.constant 1 : index
    %c0_110 = arith.constant 0 : index
    %c0_111 = arith.constant 0 : index
    %228 = vector.load %arg11[%c1_109, %c0_110, %c0_111] : memref<2x1x64xf32, #tpu.memory_space<vmem>>, vector<1x1x64xf32>
    %229 = vector.shape_cast %228 : vector<1x1x64xf32> to vector<1x64xf32>
    %230 = vector.broadcast %229 : vector<1x64xf32> to vector<16x64xf32>
    %231 = arith.addf %227, %230 : vector<16x64xf32>
    %cst_112 = arith.constant 5.000000e-01 : f32
    %232 = vector.broadcast %cst_112 : f32 to vector<16x64xf32>
    %233 = arith.mulf %232, %231 : vector<16x64xf32>
    %cst_113 = arith.constant 4.471500e-02 : f32
    %234 = vector.broadcast %cst_113 : f32 to vector<16x64xf32>
    %235 = arith.mulf %234, %231 : vector<16x64xf32>
    %236 = arith.mulf %235, %231 : vector<16x64xf32>
    %237 = arith.mulf %236, %231 : vector<16x64xf32>
    %238 = arith.addf %231, %237 : vector<16x64xf32>
    %cst_114 = arith.constant 0.797884583 : f32
    %239 = vector.broadcast %cst_114 : f32 to vector<16x64xf32>
    %240 = arith.mulf %239, %238 : vector<16x64xf32>
    %241 = math.tanh %240 : vector<16x64xf32>
    %cst_115 = arith.constant 1.000000e+00 : f32
    %242 = vector.broadcast %cst_115 : f32 to vector<16x64xf32>
    %243 = arith.addf %242, %241 : vector<16x64xf32>
    %244 = arith.mulf %233, %243 : vector<16x64xf32>
    %245 = arith.truncf %244 : vector<16x64xf32> to vector<16x64xbf16>
    %c1_116 = arith.constant 1 : index
    %c0_117 = arith.constant 0 : index
    %c0_118 = arith.constant 0 : index
    %246 = vector.load %arg12[%c1_116, %c0_117, %c0_118] : memref<2x64x32xbf16, #tpu.memory_space<vmem>>, vector<1x64x32xbf16>
    %247 = vector.shape_cast %246 : vector<1x64x32xbf16> to vector<64x32xbf16>
    %cst_119 = arith.constant dense<0.000000e+00> : vector<16x32xf32>
    %248 = tpu.matmul %245, %247, %cst_119 {dimension_numbers = #tpu.dot_dimension_numbers<[1], [0], [0], [1], [0, 0, 1, 1], [], []>} : vector<16x64xbf16>, vector<64x32xbf16>, vector<16x32xf32> -> vector<16x32xf32>
    %249 = arith.addf %197, %248 : vector<16x32xf32>
    %c1_120 = arith.constant 1 : index
    %c0_121 = arith.constant 0 : index
    %c0_122 = arith.constant 0 : index
    %250 = vector.load %arg13[%c1_120, %c0_121, %c0_122] : memref<2x1x32xf32, #tpu.memory_space<vmem>>, vector<1x1x32xf32>
    %251 = vector.shape_cast %250 : vector<1x1x32xf32> to vector<1x32xf32>
    %252 = vector.broadcast %251 : vector<1x32xf32> to vector<16x32xf32>
    %253 = arith.addf %249, %252 : vector<16x32xf32>
    %254 = vector.shape_cast %253 : vector<16x32xf32> to vector<2x8x32xf32>
    %255 = vector.extract_strided_slice %254 {offsets = [0, 0, 0], sizes = [2, 1, 32], strides = [1, 1, 1]} : vector<2x8x32xf32> to vector<2x1x32xf32>
    %256 = vector.shape_cast %255 : vector<2x1x32xf32> to vector<2x32xf32>
    %c0_123 = arith.constant 0 : index
    %c0_124 = arith.constant 0 : index
    %257 = vector.load %arg14[%c0_123, %c0_124] : memref<1x32xf32, #tpu.memory_space<vmem>>, vector<1x32xf32>
    %c0_125 = arith.constant 0 : index
    %c0_126 = arith.constant 0 : index
    %258 = vector.load %arg15[%c0_125, %c0_126] : memref<1x32xf32, #tpu.memory_space<vmem>>, vector<1x32xf32>
    %cst_127 = arith.constant dense<0.000000e+00> : vector<2xf32>
    %259 = vector.multi_reduction <add>, %256, %cst_127 [1] : vector<2x32xf32> to vector<2xf32>
    %260 = vector.shape_cast %259 : vector<2xf32> to vector<2x1xf32>
    %cst_128 = arith.constant 3.200000e+01 : f32
    %261 = vector.broadcast %cst_128 : f32 to vector<2x1xf32>
    %262 = arith.divf %260, %261 : vector<2x1xf32>
    %263 = vector.broadcast %262 : vector<2x1xf32> to vector<2x32xf32>
    %264 = arith.subf %256, %263 : vector<2x32xf32>
    %265 = arith.mulf %264, %264 : vector<2x32xf32>
    %cst_129 = arith.constant dense<0.000000e+00> : vector<2xf32>
    %266 = vector.multi_reduction <add>, %265, %cst_129 [1] : vector<2x32xf32> to vector<2xf32>
    %267 = vector.shape_cast %266 : vector<2xf32> to vector<2x1xf32>
    %cst_130 = arith.constant 3.200000e+01 : f32
    %268 = vector.broadcast %cst_130 : f32 to vector<2x1xf32>
    %269 = arith.divf %267, %268 : vector<2x1xf32>
    %270 = vector.broadcast %262 : vector<2x1xf32> to vector<2x32xf32>
    %271 = arith.subf %256, %270 : vector<2x32xf32>
    %cst_131 = arith.constant 9.99999974E-6 : f32
    %272 = vector.broadcast %cst_131 : f32 to vector<2x1xf32>
    %273 = arith.addf %269, %272 : vector<2x1xf32>
    %274 = math.rsqrt %273 : vector<2x1xf32>
    %275 = vector.broadcast %274 : vector<2x1xf32> to vector<2x32xf32>
    %276 = arith.mulf %271, %275 : vector<2x32xf32>
    %277 = vector.broadcast %257 : vector<1x32xf32> to vector<2x32xf32>
    %278 = arith.mulf %276, %277 : vector<2x32xf32>
    %279 = vector.broadcast %258 : vector<1x32xf32> to vector<2x32xf32>
    %280 = arith.addf %278, %279 : vector<2x32xf32>
    %c0_132 = arith.constant 0 : index
    %c0_133 = arith.constant 0 : index
    %281 = vector.load %arg16[%c0_132, %c0_133] : memref<1x32xf32, #tpu.memory_space<vmem>>, vector<1x32xf32>
    %282 = vector.broadcast %281 : vector<1x32xf32> to vector<2x32xf32>
    %283 = arith.mulf %280, %282 : vector<2x32xf32>
    %cst_134 = arith.constant dense<0.000000e+00> : vector<2xf32>
    %284 = vector.multi_reduction <add>, %283, %cst_134 [1] : vector<2x32xf32> to vector<2xf32>
    %285 = vector.shape_cast %284 : vector<2xf32> to vector<2x1xf32>
    %c0_135 = arith.constant 0 : index
    %c0_136 = arith.constant 0 : index
    %286 = vector.load %arg17[%c0_135, %c0_136] : memref<1x1xf32, #tpu.memory_space<vmem>>, vector<1x1xf32>
    %287 = vector.broadcast %286 : vector<1x1xf32> to vector<2x1xf32>
    %288 = arith.addf %285, %287 : vector<2x1xf32>
    %c0_137 = arith.constant 0 : index
    %c0_138 = arith.constant 0 : index
    %289 = vector.load %arg19[%c0_137, %c0_138] : memref<2x1xf32, #tpu.memory_space<vmem>>, vector<2x1xf32>
    tpu.vector_store %arg19[%c0_137, %c0_138], %288 {strides = array<i32>} : memref<2x1xf32, #tpu.memory_space<vmem>>, vector<2x1xf32>,
    %c0_139 = arith.constant 0 : index
    %c0_140 = arith.constant 0 : index
    %290 = vector.load %arg18[%c0_139, %c0_140] : memref<2x1xf32, #tpu.memory_space<vmem>>, vector<2x1xf32>
    %cst_141 = arith.constant 0.000000e+00 : f32
    %291 = vector.broadcast %cst_141 : f32 to vector<2x1xf32>
    %292 = arith.maximumf %288, %291 : vector<2x1xf32>
    %293 = arith.mulf %288, %290 : vector<2x1xf32>
    %294 = arith.subf %292, %293 : vector<2x1xf32>
    %295 = math.absf %288 : vector<2x1xf32>
    %cst_142 = arith.constant 0.000000e+00 : f32
    %296 = vector.broadcast %cst_142 : f32 to vector<2x1xf32>
    %297 = arith.subf %296, %295 : vector<2x1xf32>
    %298 = math.exp %297 : vector<2x1xf32>
    %cst_143 = arith.constant 1.000000e+00 : f32
    %299 = vector.broadcast %cst_143 : f32 to vector<2x1xf32>
    %300 = arith.addf %299, %298 : vector<2x1xf32>
    %301 = math.log %300 : vector<2x1xf32>
    %302 = arith.addf %294, %301 : vector<2x1xf32>
    %303 = vector.shape_cast %302 : vector<2x1xf32> to vector<1x2x1xf32>
    %cst_144 = arith.constant dense<0.000000e+00> : vector<1xf32>
    %304 = vector.multi_reduction <add>, %303, %cst_144 [1, 2] : vector<1x2x1xf32> to vector<1xf32>
    %305 = vector.shape_cast %304 : vector<1xf32> to vector<1x1x1xf32>
    %306 = vector.extract %305[0, 0, 0] : f32 from vector<1x1x1xf32>
    %307 = vector.broadcast %306 : f32 to vector<1x1xf32>
    %cst_145 = arith.constant 2.000000e+00 : f32
    %308 = vector.broadcast %cst_145 : f32 to vector<1x1xf32>
    %309 = arith.divf %307, %308 : vector<1x1xf32>
    %c0_146 = arith.constant 0 : index
    %c0_147 = arith.constant 0 : index
    %310 = vector.load %arg20[%c0_146, %c0_147] : memref<1x1xf32, #tpu.memory_space<vmem>>, vector<1x1xf32>
    tpu.vector_store %arg20[%c0_146, %c0_147], %309 {strides = array<i32>} : memref<1x1xf32, #tpu.memory_space<vmem>>, vector<1x1xf32>,
    return
  }
}

</mosaic_0001>

<llo_original>
// kernel: reward_model_forward.1
$region0: #{reward_model_forward.1}
  #allocation0 [shape = 'u32[]', space=smem, size = 0x4, offset = 0x4, fixed_abs, tag = 'smem constant byte address 0x4 - core index']
  #allocation1 [shape = 'u32[144,128]{1,0:T(1,128)}', space=vmem, size = 0x12000, scoped, tag = 'internal scratch']
  #allocation2 [shape = 'f32[1,1]{1,0:T(1,128)S(1)}', space=vmem, size = 0x200, scoped, tag = 'scoped memory for reward_model_forward.1']
  %s0 = inlined_call_operand.vmem [shape: f32[16,32], index: 0, kind: input, shape index: {}]
  %s1 = inlined_call_operand.vmem [shape: f32[16,16], index: 1, kind: input, shape index: {}]
  %s2 = inlined_call_operand.vmem [shape: f32[2,1,32], index: 2, kind: input, shape index: {}]
  %s3 = inlined_call_operand.vmem [shape: f32[2,1,32], index: 3, kind: input, shape index: {}]
  %s4 = inlined_call_operand.vmem [shape: bf16[2,96,32], index: 4, kind: input, shape index: {}]
  %s5 = inlined_call_operand.vmem [shape: f32[2,96,1], index: 5, kind: input, shape index: {}]
  %s6 = inlined_call_operand.vmem [shape: bf16[2,2,16,32], index: 6, kind: input, shape index: {}]
  %s7 = inlined_call_operand.vmem [shape: f32[2,1,32], index: 7, kind: input, shape index: {}]
  %s8 = inlined_call_operand.vmem [shape: f32[2,1,32], index: 8, kind: input, shape index: {}]
  %s9 = inlined_call_operand.vmem [shape: f32[2,1,32], index: 9, kind: input, shape index: {}]
  %s10 = inlined_call_operand.vmem [shape: bf16[2,32,64], index: 10, kind: input, shape index: {}]
  %s11 = inlined_call_operand.vmem [shape: f32[2,1,64], index: 11, kind: input, shape index: {}]
  %s12 = inlined_call_operand.vmem [shape: bf16[2,64,32], index: 12, kind: input, shape index: {}]
  %s13 = inlined_call_operand.vmem [shape: f32[2,1,32], index: 13, kind: input, shape index: {}]
  %s14 = inlined_call_operand.vmem [shape: f32[1,32], index: 14, kind: input, shape index: {}]
  %s15 = inlined_call_operand.vmem [shape: f32[1,32], index: 15, kind: input, shape index: {}]
  %s16 = inlined_call_operand.vmem [shape: f32[1,32], index: 16, kind: input, shape index: {}]
  %s17 = inlined_call_operand.<no memory space> [shape: f32[1,1], index: 17, kind: input, shape index: {}]
  %s18 = inlined_call_operand.vmem [shape: f32[2,1], index: 18, kind: input, shape index: {}]
  %s19 = inlined_call_operand.vmem [shape: f32[2,1], index: 19, kind: output, shape index: {0}]
  %s20 = inlined_call_operand.hbm [shape: f32[1,1], index: 20, kind: output, shape index: {1}]
  %21 = xla_tuple %s19, %s20
  %s22 = sld [smem:[#allocation0]]
  $region94: #{reward_model_forward.1} parent=0
    _
  %s24 = ssub.s32 1, %s22
  %s25 = scalar_select 0, %s24, %s22
  %v26 = vstv %s17
  %27 = vst [vmem:[#allocation2] sm:$0x1] %v26
  $region1: #{reward_model_forward.1} parent=0
    #allocation3 [shape = 'u8[512]{0}', space=vmem, size = 0x400, scoped, tag = 'output window, operand 1, single buffered']
    #allocation4 [shape = 's32[1]{0}', space=sflag, size = 0x4, scoped, tag = 'scoped memory for reward_model_forward.1']
    %28 = vsyncpa [#allocation4], 0
    // Predicated region
    $region2: #{reward_model_forward.1} parent=1 // pred_check
      _
    $region3: #{reward_model_forward.1} parent=1 // pred_check_branch
      %30 = sbr.rel (0) target = $region5
    $region4: #{reward_model_forward.1} parent=1 // pred_region
      _
    $region5: #{reward_model_forward.1} parent=1 // pred_fallthru
      _
    // Predicated region
    $region6: #{reward_model_forward.1} parent=1 // pred_check
      _
    $region7: #{reward_model_forward.1} parent=1 // pred_check_branch
      %32 = sbr.rel (0) target = $region9
    $region8: #{reward_model_forward.1} parent=1 // pred_region
      _
    $region9: #{reward_model_forward.1} parent=1 // pred_fallthru
      _
    // Predicated region
    $region10: #{reward_model_forward.1} parent=1 // pred_check
      _
    $region11: #{reward_model_forward.1} parent=1 // pred_check_branch
      %34 = sbr.rel (0) target = $region13
    $region12: #{reward_model_forward.1} parent=1 // pred_region
      _
    $region13: #{reward_model_forward.1} parent=1 // pred_fallthru
      _
    // Predicated region
    $region14: #{reward_model_forward.1} parent=1 // pred_check
      _
    $region15: #{reward_model_forward.1} parent=1 // pred_check_branch
      %36 = sbr.rel (0) target = $region17
    $region16: #{reward_model_forward.1} parent=1 // pred_region
      _
    $region17: #{reward_model_forward.1} parent=1 // pred_fallthru
      _
    // Predicated region
    $region18: #{reward_model_forward.1} parent=1 // pred_check
      _
    $region19: #{reward_model_forward.1} parent=1 // pred_check_branch
      %38 = sbr.rel (0) target = $region21
    $region20: #{reward_model_forward.1} parent=1 // pred_region
      _
    $region21: #{reward_model_forward.1} parent=1 // pred_fallthru
      _
    // Predicated region
    $region22: #{reward_model_forward.1} parent=1 // pred_check
      _
    $region23: #{reward_model_forward.1} parent=1 // pred_check_branch
      %40 = sbr.rel (0) target = $region25
    $region24: #{reward_model_forward.1} parent=1 // pred_region
      _
    $region25: #{reward_model_forward.1} parent=1 // pred_fallthru
      _
    // Predicated region
    $region26: #{reward_model_forward.1} parent=1 // pred_check
      _
    $region27: #{reward_model_forward.1} parent=1 // pred_check_branch
      %42 = sbr.rel (0) target = $region29
    $region28: #{reward_model_forward.1} parent=1 // pred_region
      _
    $region29: #{reward_model_forward.1} parent=1 // pred_fallthru
      _
    // Predicated region
    $region30: #{reward_model_forward.1} parent=1 // pred_check
      _
    $region31: #{reward_model_forward.1} parent=1 // pred_check_branch
      %44 = sbr.rel (0) target = $region33
    $region32: #{reward_model_forward.1} parent=1 // pred_region
      _
    $region33: #{reward_model_forward.1} parent=1 // pred_fallthru
      _
    // Predicated region
    $region34: #{reward_model_forward.1} parent=1 // pred_check
      _
    $region35: #{reward_model_forward.1} parent=1 // pred_check_branch
      %46 = sbr.rel (0) target = $region37
    $region36: #{reward_model_forward.1} parent=1 // pred_region
      _
    $region37: #{reward_model_forward.1} parent=1 // pred_fallthru
      _
    // Predicated region
    $region38: #{reward_model_forward.1} parent=1 // pred_check
      _
    $region39: #{reward_model_forward.1} parent=1 // pred_check_branch
      %48 = sbr.rel (0) target = $region41
    $region40: #{reward_model_forward.1} parent=1 // pred_region
      _
    $region41: #{reward_model_forward.1} parent=1 // pred_fallthru
      _
    // Predicated region
    $region42: #{reward_model_forward.1} parent=1 // pred_check
      _
    $region43: #{reward_model_forward.1} parent=1 // pred_check_branch
      %50 = sbr.rel (0) target = $region45
    $region44: #{reward_model_forward.1} parent=1 // pred_region
      _
    $region45: #{reward_model_forward.1} parent=1 // pred_fallthru
      _
    // Predicated region
    $region46: #{reward_model_forward.1} parent=1 // pred_check
      _
    $region47: #{reward_model_forward.1} parent=1 // pred_check_branch
      %52 = sbr.rel (0) target = $region49
    $region48: #{reward_model_forward.1} parent=1 // pred_region
      _
    $region49: #{reward_model_forward.1} parent=1 // pred_fallthru
      _
    // Predicated region
    $region50: #{reward_model_forward.1} parent=1 // pred_check
      _
    $region51: #{reward_model_forward.1} parent=1 // pred_check_branch
      %54 = sbr.rel (0) target = $region53
    $region52: #{reward_model_forward.1} parent=1 // pred_region
      _
    $region53: #{reward_model_forward.1} parent=1 // pred_fallthru
      _
    // Predicated region
    $region54: #{reward_model_forward.1} parent=1 // pred_check
      _
    $region55: #{reward_model_forward.1} parent=1 // pred_check_branch
      %56 = sbr.rel (0) target = $region57
    $region56: #{reward_model_forward.1} parent=1 // pred_region
      _
    $region57: #{reward_model_forward.1} parent=1 // pred_fallthru
      _
    // Predicated region
    $region58: #{reward_model_forward.1} parent=1 // pred_check
      _
    $region59: #{reward_model_forward.1} parent=1 // pred_check_branch
      %58 = sbr.rel (0) target = $region61
    $region60: #{reward_model_forward.1} parent=1 // pred_region
      _
    $region61: #{reward_model_forward.1} parent=1 // pred_fallthru
      _
    // Predicated region
    $region62: #{reward_model_forward.1} parent=1 // pred_check
      _
    $region63: #{reward_model_forward.1} parent=1 // pred_check_branch
      %60 = sbr.rel (0) target = $region65
    $region64: #{reward_model_forward.1} parent=1 // pred_region
      _
    $region65: #{reward_model_forward.1} parent=1 // pred_fallthru
      _
    // Predicated region
    $region66: #{reward_model_forward.1} parent=1 // pred_check
      _
    $region67: #{reward_model_forward.1} parent=1 // pred_check_branch
      %62 = sbr.rel (0) target = $region69
    $region68: #{reward_model_forward.1} parent=1 // pred_region
      _
    $region69: #{reward_model_forward.1} parent=1 // pred_fallthru
      _
    // Predicated region
    $region70: #{reward_model_forward.1} parent=1 // pred_check
      _
    $region71: #{reward_model_forward.1} parent=1 // pred_check_branch
      %64 = sbr.rel (0) target = $region73
    $region72: #{reward_model_forward.1} parent=1 // pred_region
      _
    $region73: #{reward_model_forward.1} parent=1 // pred_fallthru
      _
    // Predicated region
    $region74: #{reward_model_forward.1} parent=1 // pred_check
      _
    $region75: #{reward_model_forward.1} parent=1 // pred_check_branch
      %66 = sbr.rel (0) target = $region77
    $region76: #{reward_model_forward.1} parent=1 // pred_region
      _
    $region77: #{reward_model_forward.1} parent=1 // pred_fallthru
      _
    %v68 = vld [vmem:[%s0] sm:$0xff]
    %v69 = vld [vmem:[%s0 + $0x8] sm:$0xff]
    %v70 = vld [vmem:[%s1] sm:$0xff]
    %v71 = vld [vmem:[%s1 + $0x8] sm:$0xff]
    %v72 = vld [vmem:[%s2] sm:$0x1]
    %v73 = vld [vmem:[%s3] sm:$0x1]
    %vm74 = vcmask 261120
    %v75 = vsel %vm74, %v68, 0.0
    %76 = vadd.xlane.f32.xlu0 %v75
    %v77 = vpop.xlane.xlu0 %76
    %v78 = vsel %vm74, %v69, 0.0
    %79 = vadd.xlane.f32.xlu0 %v78
    %v80 = vpop.xlane.xlu0 %79
    %v81 = vrcp.pop 32.0
    %v82 = vmul.f32 %v77, %v81
    %v83 = vmul.f32 %v80, %v81
    %v84 = vsub.f32 %v68, %v82
    %v85 = vsub.f32 %v69, %v83
    %v86 = vmul.f32 %v84, %v84
    %v87 = vmul.f32 %v85, %v85
    %v88 = vsel %vm74, %v86, 0.0
    %89 = vadd.xlane.f32.xlu0 %v88
    %v90 = vpop.xlane.xlu0 %89
    %v91 = vsel %vm74, %v87, 0.0
    %92 = vadd.xlane.f32.xlu0 %v91
    %v93 = vpop.xlane.xlu0 %92
    %v94 = vmul.f32 %v90, %v81
    %v95 = vmul.f32 %v93, %v81
    %v96 = vadd.f32 %v94, 1e-05
    %v97 = vadd.f32 %v95, 1e-05
    %v98 = vrsqrt.pop %v96
    %v99 = vrsqrt.pop %v97
    %v100 = vmul.f32 %v84, %v98
    %v101 = vmul.f32 %v85, %v99
    %v103 = vlaneseq
    %v104 = vshrl.u32 %v103, 7
    %v105 = vsub.s32 0, %v104
    %v106 = vrot.slane %v72, %v105
    %v108 = vmul.f32 %v100, %v106
    %v109 = vmul.f32 %v101, %v106
    %v111 = vlaneseq
    %v112 = vshrl.u32 %v111, 7
    %v113 = vsub.s32 0, %v112
    %v114 = vrot.slane %v73, %v113
    %v116 = vadd.f32 %v108, %v114
    %v117 = vadd.f32 %v109, %v114
    %v118 = vpack.c.bf16 %v117, %v116
    %v119 = vld [vmem:[%s4] sm:$0xf]
    %v120 = vld [vmem:[%s4 + $0x4] sm:$0xf]
    %v121 = vld [vmem:[%s4 + $0x8] sm:$0xf]
    %v122 = vld [vmem:[%s4 + $0xc] sm:$0xf]
    %v123 = vld [vmem:[%s4 + $0x10] sm:$0xf]
    %v124 = vld [vmem:[%s4 + $0x14] sm:$0xf]
    %v125 = vld [vmem:[%s4 + $0x18] sm:$0xf]
    %v126 = vld [vmem:[%s4 + $0x1c] sm:$0xf]
    %v127 = vld [vmem:[%s4 + $0x20] sm:$0xf]
    %v128 = vld [vmem:[%s4 + $0x24] sm:$0xf]
    %v129 = vld [vmem:[%s4 + $0x28] sm:$0xf]
    %v130 = vld [vmem:[%s4 + $0x2c] sm:$0xf]
    %v131 = vld [vmem:[%s5] sm:$0xff]
    %v132 = vld [vmem:[%s5 + $0x8] sm:$0xff]
    %v133 = vld [vmem:[%s5 + $0x10] sm:$0xff]
    %v134 = vld [vmem:[%s5 + $0x18] sm:$0xff]
    %v135 = vld [vmem:[%s5 + $0x20] sm:$0xff]
    %v136 = vld [vmem:[%s5 + $0x28] sm:$0xff]
    %v137 = vld [vmem:[%s5 + $0x30] sm:$0xff]
    %v138 = vld [vmem:[%s5 + $0x38] sm:$0xff]
    %v139 = vld [vmem:[%s5 + $0x40] sm:$0xff]
    %v140 = vld [vmem:[%s5 + $0x48] sm:$0xff]
    %v141 = vld [vmem:[%s5 + $0x50] sm:$0xff]
    %v142 = vld [vmem:[%s5 + $0x58] sm:$0xff]
    %144 = vset.pattern.permute.xlu0 0
    %145 = vperm.xlu0 %144, %v131
    %v146 = vpop.permute.xlu0 %145
    %149 = vset.pattern.permute.xlu0 0
    %150 = vperm.xlu0 %149, %v132
    %v151 = vpop.permute.xlu0 %150
    %154 = vset.pattern.permute.xlu0 0
    %155 = vperm.xlu0 %154, %v133
    %v156 = vpop.permute.xlu0 %155
    %159 = vset.pattern.permute.xlu0 0
    %160 = vperm.xlu0 %159, %v134
    %v161 = vpop.permute.xlu0 %160
    %164 = vset.pattern.permute.xlu0 0
    %165 = vperm.xlu0 %164, %v135
    %v166 = vpop.permute.xlu0 %165
    %169 = vset.pattern.permute.xlu0 0
    %170 = vperm.xlu0 %169, %v136
    %v171 = vpop.permute.xlu0 %170
    %174 = vset.pattern.permute.xlu0 0
    %175 = vperm.xlu0 %174, %v137
    %v176 = vpop.permute.xlu0 %175
    %179 = vset.pattern.permute.xlu0 0
    %180 = vperm.xlu0 %179, %v138
    %v181 = vpop.permute.xlu0 %180
    %184 = vset.pattern.permute.xlu0 0
    %185 = vperm.xlu0 %184, %v139
    %v186 = vpop.permute.xlu0 %185
    %189 = vset.pattern.permute.xlu0 0
    %190 = vperm.xlu0 %189, %v140
    %v191 = vpop.permute.xlu0 %190
    %194 = vset.pattern.permute.xlu0 0
    %195 = vperm.xlu0 %194, %v141
    %v196 = vpop.permute.xlu0 %195
    %199 = vset.pattern.permute.xlu0 0
    %200 = vperm.xlu0 %199, %v142
    %v201 = vpop.permute.xlu0 %200
    %v215 = vunpack.c.l.b16 %v119
    %v216 = vunpack.c.l.b16 %v120
    %v217 = vunpack.c.l.b16 %v121
    %v218 = vunpack.c.l.b16 %v122
    %v219 = vunpack.c.l.b16 %v123
    %v220 = vunpack.c.l.b16 %v124
    %v221 = vunpack.c.l.b16 %v125
    %v222 = vunpack.c.l.b16 %v126
    %v223 = vunpack.c.l.b16 %v127
    %v224 = vunpack.c.l.b16 %v128
    %v225 = vunpack.c.l.b16 %v129
    %v226 = vunpack.c.l.b16 %v130
    %v227 = vpack.c.b16 %v216, %v215
    %v228 = vpack.c.b16 %v218, %v217
    %v229 = vpack.c.b16 %v220, %v219
    %v230 = vpack.c.b16 %v222, %v221
    %v231 = vpack.c.b16 %v224, %v223
    %v232 = vpack.c.b16 %v226, %v225
    %v234 = vsel %vm74, %v227, 0
    %v237 = vsel %vm74, %v228, 0
    %v240 = vsel %vm74, %v229, 0
    %v243 = vsel %vm74, %v230, 0
    %v246 = vsel %vm74, %v231, 0
    %v249 = vsel %vm74, %v232, 0
    %v252 = vsel %vm74, %v118, 0
    %254 = vmatprep.subr.bf16.mxu0 0
    %255 = vmatpush1.bf16.xpose.msra.mxu0 0
    %256 = vmatprep.subr.bf16.mxu0 0
    %257 = vmatpush1.bf16.xpose.msra.mxu0 0
    %258 = vmatprep.subr.bf16.mxu0 0
    %259 = vmatpush1.bf16.xpose.msra.mxu0 0
    %260 = vmatprep.subr.bf16.mxu0 0
    %261 = vmatpush1.bf16.xpose.msra.mxu0 0
    %262 = vmatprep.subr.bf16.mxu0 0
    %263 = vmatpush1.bf16.xpose.msra.mxu0 0
    %264 = vmatprep.subr.bf16.mxu0 0
    %265 = vmatpush1.bf16.xpose.msra.mxu0 0
    %266 = vmatprep.subr.bf16.mxu0 0
    %267 = vmatpush1.bf16.xpose.msra.mxu0 0
    %268 = vmatprep.subr.bf16.mxu0 0
    %269 = vmatpush1.bf16.xpose.msra.mxu0 %v252
    %270 = vmatprep.subr.bf16.mxu0 0
    %271 = vmatpush2.bf16.xpose.msra.mxu0 0
    %272 = vmatprep.subr.bf16.mxu0 0
    %273 = vmatpush2.bf16.xpose.msra.mxu0 0
    %274 = vmatprep.subr.bf16.mxu0 0
    %275 = vmatpush2.bf16.xpose.msra.mxu0 0
    %276 = vmatprep.subr.bf16.mxu0 0
    %277 = vmatpush2.bf16.xpose.msra.mxu0 0
    %278 = vmatprep.subr.bf16.mxu0 0
    %279 = vmatpush2.bf16.xpose.msra.mxu0 0
    %280 = vmatprep.subr.bf16.mxu0 0
    %281 = vmatpush2.bf16.xpose.msra.mxu0 0
    %282 = vmatprep.subr.bf16.mxu0 0
    %283 = vmatpush2.bf16.xpose.msra.mxu0 0
    %284 = vmatprep.subr.bf16.mxu0 0
    %285 = vmatpush2.bf16.xpose.msra.mxu0 0
    %286 = vmatprep.mubr.bf16.mxu0 0
    %287 = vmatmul.mubr.bf16.gmra.mxu0 %v234
    %v288 = vpop.f32.mrf.mxu0
    %v289 = vadd.f32 %v146, %v288
    %v290 = vpop.f32.mrf.mxu0
    %v291 = vpop.f32.mrf.mxu0
    %v292 = vadd.f32 %v151, %v291
    %v293 = vpop.f32.mrf.mxu0
    %294 = vmatprep.mubr.bf16.mxu0 0
    %295 = vmatmul.mubr.bf16.gmra.mxu0 %v237
    %v296 = vpop.f32.mrf.mxu0
    %v297 = vadd.f32 %v156, %v296
    %v298 = vpop.f32.mrf.mxu0
    %v299 = vpop.f32.mrf.mxu0
    %v300 = vadd.f32 %v161, %v299
    %v301 = vpop.f32.mrf.mxu0
    %302 = vmatprep.mubr.bf16.mxu0 0
    %303 = vmatmul.mubr.bf16.gmra.mxu0 %v240
    %v304 = vpop.f32.mrf.mxu0
    %v305 = vadd.f32 %v166, %v304
    %v306 = vpop.f32.mrf.mxu0
    %v307 = vpop.f32.mrf.mxu0
    %v308 = vadd.f32 %v171, %v307
    %v309 = vpop.f32.mrf.mxu0
    %310 = vmatprep.mubr.bf16.mxu0 0
    %311 = vmatmul.mubr.bf16.gmra.mxu0 %v243
    %v312 = vpop.f32.mrf.mxu0
    %v313 = vadd.f32 %v176, %v312
    %v314 = vpop.f32.mrf.mxu0
    %v315 = vpop.f32.mrf.mxu0
    %v316 = vadd.f32 %v181, %v315
    %v317 = vpop.f32.mrf.mxu0
    %318 = vmatprep.mubr.bf16.mxu0 0
    %319 = vmatmul.mubr.bf16.gmra.mxu0 %v246
    %v320 = vpop.f32.mrf.mxu0
    %v321 = vadd.f32 %v186, %v320
    %v322 = vpop.f32.mrf.mxu0
    %v323 = vpop.f32.mrf.mxu0
    %v324 = vadd.f32 %v191, %v323
    %v325 = vpop.f32.mrf.mxu0
    %326 = vmatprep.mubr.bf16.mxu0 0
    %327 = vmatmul.mubr.bf16.gmra.mxu0 %v249
    %v328 = vpop.f32.mrf.mxu0
    %v329 = vadd.f32 %v196, %v328
    %v330 = vpop.f32.mrf.mxu0
    %v331 = vpop.f32.mrf.mxu0
    %v332 = vadd.f32 %v201, %v331
    %v333 = vpop.f32.mrf.mxu0
    %334 = vdwg.mxu0
    %335 = vxpose.xlu0.b32.start [1/16] %v289, 128
    %336 = vxpose.xlu0.b32.cont [2/16] %v292, 128
    %337 = vxpose.xlu0.b32.cont [3/16] 0.0, 128
    %338 = vxpose.xlu0.b32.cont [4/16] 0.0, 128
    %339 = vxpose.xlu0.b32.cont [5/16] 0.0, 128
    %340 = vxpose.xlu0.b32.cont [6/16] 0.0, 128
    %341 = vxpose.xlu0.b32.cont [7/16] 0.0, 128
    %342 = vxpose.xlu0.b32.cont [8/16] 0.0, 128
    %343 = vxpose.xlu0.b32.cont [9/16] 0.0, 128
    %344 = vxpose.xlu0.b32.cont [10/16] 0.0, 128
    %345 = vxpose.xlu0.b32.cont [11/16] 0.0, 128
    %346 = vxpose.xlu0.b32.cont [12/16] 0.0, 128
    %347 = vxpose.xlu0.b32.cont [13/16] 0.0, 128
    %348 = vxpose.xlu0.b32.cont [14/16] 0.0, 128
    %349 = vxpose.xlu0.b32.cont [15/16] 0.0, 128
    %350 = vxpose.xlu0.b32.end [16/16] 0.0, 128
    %v351 = vpop.trf.xlu0
    %v352 = vpop.trf.xlu0
    %v353 = vpop.trf.xlu0
    %v354 = vpop.trf.xlu0
    %v355 = vpop.trf.xlu0
    %v356 = vpop.trf.xlu0
    %v357 = vpop.trf.xlu0
    %v358 = vpop.trf.xlu0
    %v359 = vpop.trf.xlu0
    %v360 = vpop.trf.xlu0
    %v361 = vpop.trf.xlu0
    %v362 = vpop.trf.xlu0
    %v363 = vpop.trf.xlu0
    %v364 = vpop.trf.xlu0
    %v365 = vpop.trf.xlu0
    %v366 = vpop.trf.xlu0
    %367 = vxpose.xlu0.b32.start [1/16] %v297, 128
    %368 = vxpose.xlu0.b32.cont [2/16] %v300, 128
    %369 = vxpose.xlu0.b32.cont [3/16] 0.0, 128
    %370 = vxpose.xlu0.b32.cont [4/16] 0.0, 128
    %371 = vxpose.xlu0.b32.cont [5/16] 0.0, 128
    %372 = vxpose.xlu0.b32.cont [6/16] 0.0, 128
    %373 = vxpose.xlu0.b32.cont [7/16] 0.0, 128
    %374 = vxpose.xlu0.b32.cont [8/16] 0.0, 128
    %375 = vxpose.xlu0.b32.cont [9/16] 0.0, 128
    %376 = vxpose.xlu0.b32.cont [10/16] 0.0, 128
    %377 = vxpose.xlu0.b32.cont [11/16] 0.0, 128
    %378 = vxpose.xlu0.b32.cont [12/16] 0.0, 128
    %379 = vxpose.xlu0.b32.cont [13/16] 0.0, 128
    %380 = vxpose.xlu0.b32.cont [14/16] 0.0, 128
    %381 = vxpose.xlu0.b32.cont [15/16] 0.0, 128
    %382 = vxpose.xlu0.b32.end [16/16] 0.0, 128
    %v383 = vpop.trf.xlu0
    %v384 = vpop.trf.xlu0
    %v385 = vpop.trf.xlu0
    %v386 = vpop.trf.xlu0
    %v387 = vpop.trf.xlu0
    %v388 = vpop.trf.xlu0
    %v389 = vpop.trf.xlu0
    %v390 = vpop.trf.xlu0
    %v391 = vpop.trf.xlu0
    %v392 = vpop.trf.xlu0
    %v393 = vpop.trf.xlu0
    %v394 = vpop.trf.xlu0
    %v395 = vpop.trf.xlu0
    %v396 = vpop.trf.xlu0
    %v397 = vpop.trf.xlu0
    %v398 = vpop.trf.xlu0
    %399 = vxpose.xlu0.b32.start [1/16] %v305, 128
    %400 = vxpose.xlu0.b32.cont [2/16] %v308, 128
    %401 = vxpose.xlu0.b32.cont [3/16] 0.0, 128
    %402 = vxpose.xlu0.b32.cont [4/16] 0.0, 128
    %403 = vxpose.xlu0.b32.cont [5/16] 0.0, 128
    %404 = vxpose.xlu0.b32.cont [6/16] 0.0, 128
    %405 = vxpose.xlu0.b32.cont [7/16] 0.0, 128
    %406 = vxpose.xlu0.b32.cont [8/16] 0.0, 128
    %407 = vxpose.xlu0.b32.cont [9/16] 0.0, 128
    %408 = vxpose.xlu0.b32.cont [10/16] 0.0, 128
    %409 = vxpose.xlu0.b32.cont [11/16] 0.0, 128
    %410 = vxpose.xlu0.b32.cont [12/16] 0.0, 128
    %411 = vxpose.xlu0.b32.cont [13/16] 0.0, 128
    %412 = vxpose.xlu0.b32.cont [14/16] 0.0, 128
    %413 = vxpose.xlu0.b32.cont [15/16] 0.0, 128
    %414 = vxpose.xlu0.b32.end [16/16] 0.0, 128
    %v415 = vpop.trf.xlu0
    %v416 = vpop.trf.xlu0
    %v417 = vpop.trf.xlu0
    %v418 = vpop.trf.xlu0
    %v419 = vpop.trf.xlu0
    %v420 = vpop.trf.xlu0
    %v421 = vpop.trf.xlu0
    %v422 = vpop.trf.xlu0
    %v423 = vpop.trf.xlu0
    %v424 = vpop.trf.xlu0
    %v425 = vpop.trf.xlu0
    %v426 = vpop.trf.xlu0
    %v427 = vpop.trf.xlu0
    %v428 = vpop.trf.xlu0
    %v429 = vpop.trf.xlu0
    %v430 = vpop.trf.xlu0
    %431 = vxpose.xlu0.b32.start [1/16] %v313, 128
    %432 = vxpose.xlu0.b32.cont [2/16] %v316, 128
    %433 = vxpose.xlu0.b32.cont [3/16] 0.0, 128
    %434 = vxpose.xlu0.b32.cont [4/16] 0.0, 128
    %435 = vxpose.xlu0.b32.cont [5/16] 0.0, 128
    %436 = vxpose.xlu0.b32.cont [6/16] 0.0, 128
    %437 = vxpose.xlu0.b32.cont [7/16] 0.0, 128
    %438 = vxpose.xlu0.b32.cont [8/16] 0.0, 128
    %439 = vxpose.xlu0.b32.cont [9/16] 0.0, 128
    %440 = vxpose.xlu0.b32.cont [10/16] 0.0, 128
    %441 = vxpose.xlu0.b32.cont [11/16] 0.0, 128
    %442 = vxpose.xlu0.b32.cont [12/16] 0.0, 128
    %443 = vxpose.xlu0.b32.cont [13/16] 0.0, 128
    %444 = vxpose.xlu0.b32.cont [14/16] 0.0, 128
    %445 = vxpose.xlu0.b32.cont [15/16] 0.0, 128
    %446 = vxpose.xlu0.b32.end [16/16] 0.0, 128
    %v447 = vpop.trf.xlu0
    %v448 = vpop.trf.xlu0
    %v449 = vpop.trf.xlu0
    %v450 = vpop.trf.xlu0
    %v451 = vpop.trf.xlu0
    %v452 = vpop.trf.xlu0
    %v453 = vpop.trf.xlu0
    %v454 = vpop.trf.xlu0
    %v455 = vpop.trf.xlu0
    %v456 = vpop.trf.xlu0
    %v457 = vpop.trf.xlu0
    %v458 = vpop.trf.xlu0
    %v459 = vpop.trf.xlu0
    %v460 = vpop.trf.xlu0
    %v461 = vpop.trf.xlu0
    %v462 = vpop.trf.xlu0
    %463 = vxpose.xlu0.b32.start [1/16] %v321, 128
    %464 = vxpose.xlu0.b32.cont [2/16] %v324, 128
    %465 = vxpose.xlu0.b32.cont [3/16] 0.0, 128
    %466 = vxpose.xlu0.b32.cont [4/16] 0.0, 128
    %467 = vxpose.xlu0.b32.cont [5/16] 0.0, 128
    %468 = vxpose.xlu0.b32.cont [6/16] 0.0, 128
    %469 = vxpose.xlu0.b32.cont [7/16] 0.0, 128
    %470 = vxpose.xlu0.b32.cont [8/16] 0.0, 128
    %471 = vxpose.xlu0.b32.cont [9/16] 0.0, 128
    %472 = vxpose.xlu0.b32.cont [10/16] 0.0, 128
    %473 = vxpose.xlu0.b32.cont [11/16] 0.0, 128
    %474 = vxpose.xlu0.b32.cont [12/16] 0.0, 128
    %475 = vxpose.xlu0.b32.cont [13/16] 0.0, 128
    %476 = vxpose.xlu0.b32.cont [14/16] 0.0, 128
    %477 = vxpose.xlu0.b32.cont [15/16] 0.0, 128
    %478 = vxpose.xlu0.b32.end [16/16] 0.0, 128
    %v479 = vpop.trf.xlu0
    %v480 = vpop.trf.xlu0
    %v481 = vpop.trf.xlu0
    %v482 = vpop.trf.xlu0
    %v483 = vpop.trf.xlu0
    %v484 = vpop.trf.xlu0
    %v485 = vpop.trf.xlu0
    %v486 = vpop.trf.xlu0
    %v487 = vpop.trf.xlu0
    %v488 = vpop.trf.xlu0
    %v489 = vpop.trf.xlu0
    %v490 = vpop.trf.xlu0
    %v491 = vpop.trf.xlu0
    %v492 = vpop.trf.xlu0
    %v493 = vpop.trf.xlu0
    %v494 = vpop.trf.xlu0
    %495 = vxpose.xlu0.b32.start [1/16] %v329, 128
    %496 = vxpose.xlu0.b32.cont [2/16] %v332, 128
    %497 = vxpose.xlu0.b32.cont [3/16] 0.0, 128
    %498 = vxpose.xlu0.b32.cont [4/16] 0.0, 128
    %499 = vxpose.xlu0.b32.cont [5/16] 0.0, 128
    %500 = vxpose.xlu0.b32.cont [6/16] 0.0, 128
    %501 = vxpose.xlu0.b32.cont [7/16] 0.0, 128
    %502 = vxpose.xlu0.b32.cont [8/16] 0.0, 128
    %503 = vxpose.xlu0.b32.cont [9/16] 0.0, 128
    %504 = vxpose.xlu0.b32.cont [10/16] 0.0, 128
    %505 = vxpose.xlu0.b32.cont [11/16] 0.0, 128
    %506 = vxpose.xlu0.b32.cont [12/16] 0.0, 128
    %507 = vxpose.xlu0.b32.cont [13/16] 0.0, 128
    %508 = vxpose.xlu0.b32.cont [14/16] 0.0, 128
    %509 = vxpose.xlu0.b32.cont [15/16] 0.0, 128
    %510 = vxpose.xlu0.b32.end [16/16] 0.0, 128
    %v511 = vpop.trf.xlu0
    %v512 = vpop.trf.xlu0
    %v513 = vpop.trf.xlu0
    %v514 = vpop.trf.xlu0
    %v515 = vpop.trf.xlu0
    %v516 = vpop.trf.xlu0
    %v517 = vpop.trf.xlu0
    %v518 = vpop.trf.xlu0
    %v519 = vpop.trf.xlu0
    %v520 = vpop.trf.xlu0
    %v521 = vpop.trf.xlu0
    %v522 = vpop.trf.xlu0
    %v523 = vpop.trf.xlu0
    %v524 = vpop.trf.xlu0
    %v525 = vpop.trf.xlu0
    %v526 = vpop.trf.xlu0
    %v527 = vmul.f32 %v351, 0.25
    %v528 = vmul.f32 %v352, 0.25
    %v529 = vmul.f32 %v383, 0.25
    %v530 = vmul.f32 %v384, 0.25
    %v531 = vpack.c.bf16 %v528, %v527
    %v532 = vpack.c.bf16 %v530, %v529
    %v533 = vpack.c.bf16 %v416, %v415
    %v534 = vpack.c.bf16 %v448, %v447
    %v535 = vpack.c.bf16 %v480, %v479
    %v536 = vpack.c.bf16 %v512, %v511
    %vm537 = vcmask 130048
    %v539 = vsel %vm537, %v531, 0
    %v542 = vsel %vm537, %v533, 0
    %544 = vmatprep.subr.bf16.mxu0 0
    %545 = vmatpush1.bf16.xpose.msra.mxu0 0
    %546 = vmatprep.subr.bf16.mxu0 0
    %547 = vmatpush1.bf16.xpose.msra.mxu0 0
    %548 = vmatprep.subr.bf16.mxu0 0
    %549 = vmatpush1.bf16.xpose.msra.mxu0 0
    %550 = vmatprep.subr.bf16.mxu0 0
    %551 = vmatpush1.bf16.xpose.msra.mxu0 0
    %552 = vmatprep.subr.bf16.mxu0 0
    %553 = vmatpush1.bf16.xpose.msra.mxu0 0
    %554 = vmatprep.subr.bf16.mxu0 0
    %555 = vmatpush1.bf16.xpose.msra.mxu0 0
    %556 = vmatprep.subr.bf16.mxu0 0
    %557 = vmatpush1.bf16.xpose.msra.mxu0 0
    %558 = vmatprep.subr.bf16.mxu0 0
    %559 = vmatpush1.bf16.xpose.msra.mxu0 %v542
    %560 = vmatprep.subr.bf16.mxu0 0
    %561 = vmatpush2.bf16.xpose.msra.mxu0 0
    %562 = vmatprep.subr.bf16.mxu0 0
    %563 = vmatpush2.bf16.xpose.msra.mxu0 0
    %564 = vmatprep.subr.bf16.mxu0 0
    %565 = vmatpush2.bf16.xpose.msra.mxu0 0
    %566 = vmatprep.subr.bf16.mxu0 0
    %567 = vmatpush2.bf16.xpose.msra.mxu0 0
    %568 = vmatprep.subr.bf16.mxu0 0
    %569 = vmatpush2.bf16.xpose.msra.mxu0 0
    %570 = vmatprep.subr.bf16.mxu0 0
    %571 = vmatpush2.bf16.xpose.msra.mxu0 0
    %572 = vmatprep.subr.bf16.mxu0 0
    %573 = vmatpush2.bf16.xpose.msra.mxu0 0
    %574 = vmatprep.subr.bf16.mxu0 0
    %575 = vmatpush2.bf16.xpose.msra.mxu0 0
    %576 = vmatprep.mubr.bf16.mxu0 0
    %577 = vmatmul.mubr.bf16.gmra.mxu0 %v539
    %v578 = vpop.f32.mrf.mxu0
    %v579 = vadd.f32 %v70, %v578
    %v580 = vpop.f32.mrf.mxu0
    %v581 = vpop.f32.mrf.mxu0
    %v582 = vadd.f32 %v71, %v581
    %v583 = vpop.f32.mrf.mxu0
    %584 = vdwg.mxu0
    %v586 = vsel %vm537, %v532, 0
    %v589 = vsel %vm537, %v534, 0
    %591 = vmatprep.subr.bf16.mxu0 0
    %592 = vmatpush1.bf16.xpose.msra.mxu0 0
    %593 = vmatprep.subr.bf16.mxu0 0
    %594 = vmatpush1.bf16.xpose.msra.mxu0 0
    %595 = vmatprep.subr.bf16.mxu0 0
    %596 = vmatpush1.bf16.xpose.msra.mxu0 0
    %597 = vmatprep.subr.bf16.mxu0 0
    %598 = vmatpush1.bf16.xpose.msra.mxu0 0
    %599 = vmatprep.subr.bf16.mxu0 0
    %600 = vmatpush1.bf16.xpose.msra.mxu0 0
    %601 = vmatprep.subr.bf16.mxu0 0
    %602 = vmatpush1.bf16.xpose.msra.mxu0 0
    %603 = vmatprep.subr.bf16.mxu0 0
    %604 = vmatpush1.bf16.xpose.msra.mxu0 0
    %605 = vmatprep.subr.bf16.mxu0 0
    %606 = vmatpush1.bf16.xpose.msra.mxu0 %v589
    %607 = vmatprep.subr.bf16.mxu0 0
    %608 = vmatpush2.bf16.xpose.msra.mxu0 0
    %609 = vmatprep.subr.bf16.mxu0 0
    %610 = vmatpush2.bf16.xpose.msra.mxu0 0
    %611 = vmatprep.subr.bf16.mxu0 0
    %612 = vmatpush2.bf16.xpose.msra.mxu0 0
    %613 = vmatprep.subr.bf16.mxu0 0
    %614 = vmatpush2.bf16.xpose.msra.mxu0 0
    %615 = vmatprep.subr.bf16.mxu0 0
    %616 = vmatpush2.bf16.xpose.msra.mxu0 0
    %617 = vmatprep.subr.bf16.mxu0 0
    %618 = vmatpush2.bf16.xpose.msra.mxu0 0
    %619 = vmatprep.subr.bf16.mxu0 0
    %620 = vmatpush2.bf16.xpose.msra.mxu0 0
    %621 = vmatprep.subr.bf16.mxu0 0
    %622 = vmatpush2.bf16.xpose.msra.mxu0 0
    %623 = vmatprep.mubr.bf16.mxu0 0
    %624 = vmatmul.mubr.bf16.gmra.mxu0 %v586
    %v625 = vpop.f32.mrf.mxu0
    %v626 = vadd.f32 %v70, %v625
    %v627 = vpop.f32.mrf.mxu0
    %v628 = vpop.f32.mrf.mxu0
    %v629 = vadd.f32 %v71, %v628
    %v630 = vpop.f32.mrf.mxu0
    %631 = vdwg.mxu0
    %v632 = vsel %vm537, %v579, -inf
    %633 = vmax.xlane.f32.xlu0 %v632
    %v634 = vpop.xlane.xlu0 %633
    %v635 = vsel %vm537, %v582, -inf
    %636 = vmax.xlane.f32.xlu0 %v635
    %v637 = vpop.xlane.xlu0 %636
    %v638 = vsel %vm537, %v626, -inf
    %639 = vmax.xlane.f32.xlu0 %v638
    %v640 = vpop.xlane.xlu0 %639
    %v641 = vsel %vm537, %v629, -inf
    %642 = vmax.xlane.f32.xlu0 %v641
    %v643 = vpop.xlane.xlu0 %642
    %v644 = vsub.f32 %v579, %v634
    %v645 = vsub.f32 %v582, %v637
    %v646 = vsub.f32 %v626, %v640
    %v647 = vsub.f32 %v629, %v643
    %v648 = vmul.f32 %v644, 1.442695
    %v649 = vpow.pop %v648
    %v650 = vmul.f32 %v645, 1.442695
    %v651 = vpow.pop %v650
    %v652 = vmul.f32 %v646, 1.442695
    %v653 = vpow.pop %v652
    %v654 = vmul.f32 %v647, 1.442695
    %v655 = vpow.pop %v654
    %v656 = vsel %vm537, %v649, 0.0
    %657 = vadd.xlane.f32.xlu0 %v656
    %v658 = vpop.xlane.xlu0 %657
    %v659 = vsel %vm537, %v651, 0.0
    %660 = vadd.xlane.f32.xlu0 %v659
    %v661 = vpop.xlane.xlu0 %660
    %v662 = vsel %vm537, %v653, 0.0
    %663 = vadd.xlane.f32.xlu0 %v662
    %v664 = vpop.xlane.xlu0 %663
    %v665 = vsel %vm537, %v655, 0.0
    %666 = vadd.xlane.f32.xlu0 %v665
    %v667 = vpop.xlane.xlu0 %666
    %v668 = vrcp.pop %v658
    %v669 = vrcp.pop %v661
    %v670 = vrcp.pop %v664
    %v671 = vrcp.pop %v667
    %v672 = vmul.f32 %v649, %v668
    %v673 = vmul.f32 %v651, %v669
    %v674 = vmul.f32 %v653, %v670
    %v675 = vmul.f32 %v655, %v671
    %v676 = vpack.c.bf16 %v673, %v672
    %v677 = vpack.c.bf16 %v675, %v674
    %v679 = vsel %vm537, %v676, 0
    %681 = vmatprep.subr.bf16.mxu0 0
    %682 = vmatpush1.bf16.msra.mxu0 0
    %683 = vmatprep.subr.bf16.mxu0 0
    %684 = vmatpush1.bf16.msra.mxu0 0
    %685 = vmatprep.subr.bf16.mxu0 0
    %686 = vmatpush1.bf16.msra.mxu0 0
    %687 = vmatprep.subr.bf16.mxu0 0
    %688 = vmatpush1.bf16.msra.mxu0 0
    %689 = vmatprep.subr.bf16.mxu0 0
    %690 = vmatpush1.bf16.msra.mxu0 0
    %691 = vmatprep.subr.bf16.mxu0 0
    %692 = vmatpush1.bf16.msra.mxu0 0
    %693 = vmatprep.subr.bf16.mxu0 0
    %694 = vmatpush1.bf16.msra.mxu0 0
    %695 = vmatprep.subr.bf16.mxu0 0
    %696 = vmatpush1.bf16.msra.mxu0 %v535
    %697 = vmatprep.subr.bf16.mxu0 0
    %698 = vmatpush2.bf16.msra.mxu0 0
    %699 = vmatprep.subr.bf16.mxu0 0
    %700 = vmatpush2.bf16.msra.mxu0 0
    %701 = vmatprep.subr.bf16.mxu0 0
    %702 = vmatpush2.bf16.msra.mxu0 0
    %703 = vmatprep.subr.bf16.mxu0 0
    %704 = vmatpush2.bf16.msra.mxu0 0
    %705 = vmatprep.subr.bf16.mxu0 0
    %706 = vmatpush2.bf16.msra.mxu0 0
    %707 = vmatprep.subr.bf16.mxu0 0
    %708 = vmatpush2.bf16.msra.mxu0 0
    %709 = vmatprep.subr.bf16.mxu0 0
    %710 = vmatpush2.bf16.msra.mxu0 0
    %711 = vmatprep.subr.bf16.mxu0 0
    %712 = vmatpush2.bf16.msra.mxu0 0
    %713 = vmatprep.mubr.bf16.mxu0 0
    %714 = vmatmul.mubr.bf16.gmra.mxu0 %v679
    %v715 = vpop.f32.mrf.mxu0
    %v716 = vadd.f32 0.0, %v715
    %v717 = vpop.f32.mrf.mxu0
    %v718 = vpop.f32.mrf.mxu0
    %v719 = vadd.f32 0.0, %v718
    %v720 = vpop.f32.mrf.mxu0
    %721 = vdwg.mxu0
    %v723 = vsel %vm537, %v677, 0
    %725 = vmatprep.subr.bf16.mxu0 0
    %726 = vmatpush1.bf16.msra.mxu0 0
    %727 = vmatprep.subr.bf16.mxu0 0
    %728 = vmatpush1.bf16.msra.mxu0 0
    %729 = vmatprep.subr.bf16.mxu0 0
    %730 = vmatpush1.bf16.msra.mxu0 0
    %731 = vmatprep.subr.bf16.mxu0 0
    %732 = vmatpush1.bf16.msra.mxu0 0
    %733 = vmatprep.subr.bf16.mxu0 0
    %734 = vmatpush1.bf16.msra.mxu0 0
    %735 = vmatprep.subr.bf16.mxu0 0
    %736 = vmatpush1.bf16.msra.mxu0 0
    %737 = vmatprep.subr.bf16.mxu0 0
    %738 = vmatpush1.bf16.msra.mxu0 0
    %739 = vmatprep.subr.bf16.mxu0 0
    %740 = vmatpush1.bf16.msra.mxu0 %v536
    %741 = vmatprep.subr.bf16.mxu0 0
    %742 = vmatpush2.bf16.msra.mxu0 0
    %743 = vmatprep.subr.bf16.mxu0 0
    %744 = vmatpush2.bf16.msra.mxu0 0
    %745 = vmatprep.subr.bf16.mxu0 0
    %746 = vmatpush2.bf16.msra.mxu0 0
    %747 = vmatprep.subr.bf16.mxu0 0
    %748 = vmatpush2.bf16.msra.mxu0 0
    %749 = vmatprep.subr.bf16.mxu0 0
    %750 = vmatpush2.bf16.msra.mxu0 0
    %751 = vmatprep.subr.bf16.mxu0 0
    %752 = vmatpush2.bf16.msra.mxu0 0
    %753 = vmatprep.subr.bf16.mxu0 0
    %754 = vmatpush2.bf16.msra.mxu0 0
    %755 = vmatprep.subr.bf16.mxu0 0
    %756 = vmatpush2.bf16.msra.mxu0 0
    %757 = vmatprep.mubr.bf16.mxu0 0
    %758 = vmatmul.mubr.bf16.gmra.mxu0 %v723
    %v759 = vpop.f32.mrf.mxu0
    %v760 = vadd.f32 0.0, %v759
    %v761 = vpop.f32.mrf.mxu0
    %v762 = vpop.f32.mrf.mxu0
    %v763 = vadd.f32 0.0, %v762
    %v764 = vpop.f32.mrf.mxu0
    %765 = vdwg.mxu0
    %v766 = vpack.c.bf16 %v719, %v716
    %v767 = vpack.c.bf16 %v763, %v760
    %v768 = vld [vmem:[%s6] sm:$0xf]
    %v769 = vld [vmem:[%s6 + $0x4] sm:$0xf]
    %v770 = vld [vmem:[%s6 + $0x8] sm:$0xf]
    %v771 = vld [vmem:[%s6 + $0xc] sm:$0xf]
    %v774 = vunpack.c.l.b16 %v768
    %v775 = vunpack.c.l.b16 %v769
    %v776 = vpack.c.b16 %v775, %v774
    %v779 = vsel %vm537, %v766, 0
    %781 = vmatprep.subr.bf16.mxu0 0
    %782 = vmatpush1.bf16.msra.mxu0 0
    %783 = vmatprep.subr.bf16.mxu0 0
    %784 = vmatpush1.bf16.msra.mxu0 0
    %785 = vmatprep.subr.bf16.mxu0 0
    %786 = vmatpush1.bf16.msra.mxu0 0
    %787 = vmatprep.subr.bf16.mxu0 0
    %788 = vmatpush1.bf16.msra.mxu0 0
    %789 = vmatprep.subr.bf16.mxu0 0
    %790 = vmatpush1.bf16.msra.mxu0 0
    %791 = vmatprep.subr.bf16.mxu0 0
    %792 = vmatpush1.bf16.msra.mxu0 0
    %793 = vmatprep.subr.bf16.mxu0 0
    %794 = vmatpush1.bf16.msra.mxu0 0
    %795 = vmatprep.subr.bf16.mxu0 0
    %796 = vmatpush1.bf16.msra.mxu0 %v776
    %797 = vmatprep.subr.bf16.mxu0 0
    %798 = vmatpush2.bf16.msra.mxu0 0
    %799 = vmatprep.subr.bf16.mxu0 0
    %800 = vmatpush2.bf16.msra.mxu0 0
    %801 = vmatprep.subr.bf16.mxu0 0
    %802 = vmatpush2.bf16.msra.mxu0 0
    %803 = vmatprep.subr.bf16.mxu0 0
    %804 = vmatpush2.bf16.msra.mxu0 0
    %805 = vmatprep.subr.bf16.mxu0 0
    %806 = vmatpush2.bf16.msra.mxu0 0
    %807 = vmatprep.subr.bf16.mxu0 0
    %808 = vmatpush2.bf16.msra.mxu0 0
    %809 = vmatprep.subr.bf16.mxu0 0
    %810 = vmatpush2.bf16.msra.mxu0 0
    %811 = vmatprep.subr.bf16.mxu0 0
    %812 = vmatpush2.bf16.msra.mxu0 0
    %813 = vmatprep.mubr.bf16.mxu0 0
    %814 = vmatmul.mubr.bf16.gmra.mxu0 %v779
    %v815 = vpop.f32.mrf.mxu0
    %v816 = vadd.f32 0.0, %v815
    %v817 = vpop.f32.mrf.mxu0
    %v818 = vpop.f32.mrf.mxu0
    %v819 = vadd.f32 0.0, %v818
    %v820 = vpop.f32.mrf.mxu0
    %821 = vdwg.mxu0
    %v824 = vunpack.c.l.b16 %v770
    %v825 = vunpack.c.l.b16 %v771
    %v826 = vpack.c.b16 %v825, %v824
    %v829 = vsel %vm537, %v767, 0
    %831 = vmatprep.subr.bf16.mxu0 0
    %832 = vmatpush1.bf16.msra.mxu0 0
    %833 = vmatprep.subr.bf16.mxu0 0
    %834 = vmatpush1.bf16.msra.mxu0 0
    %835 = vmatprep.subr.bf16.mxu0 0
    %836 = vmatpush1.bf16.msra.mxu0 0
    %837 = vmatprep.subr.bf16.mxu0 0
    %838 = vmatpush1.bf16.msra.mxu0 0
    %839 = vmatprep.subr.bf16.mxu0 0
    %840 = vmatpush1.bf16.msra.mxu0 0
    %841 = vmatprep.subr.bf16.mxu0 0
    %842 = vmatpush1.bf16.msra.mxu0 0
    %843 = vmatprep.subr.bf16.mxu0 0
    %844 = vmatpush1.bf16.msra.mxu0 0
    %845 = vmatprep.subr.bf16.mxu0 0
    %846 = vmatpush1.bf16.msra.mxu0 %v826
    %847 = vmatprep.subr.bf16.mxu0 0
    %848 = vmatpush2.bf16.msra.mxu0 0
    %849 = vmatprep.subr.bf16.mxu0 0
    %850 = vmatpush2.bf16.msra.mxu0 0
    %851 = vmatprep.subr.bf16.mxu0 0
    %852 = vmatpush2.bf16.msra.mxu0 0
    %853 = vmatprep.subr.bf16.mxu0 0
    %854 = vmatpush2.bf16.msra.mxu0 0
    %855 = vmatprep.subr.bf16.mxu0 0
    %856 = vmatpush2.bf16.msra.mxu0 0
    %857 = vmatprep.subr.bf16.mxu0 0
    %858 = vmatpush2.bf16.msra.mxu0 0
    %859 = vmatprep.subr.bf16.mxu0 0
    %860 = vmatpush2.bf16.msra.mxu0 0
    %861 = vmatprep.subr.bf16.mxu0 0
    %862 = vmatpush2.bf16.msra.mxu0 0
    %863 = vmatprep.mubr.bf16.mxu0 0
    %864 = vmatmul.mubr.bf16.gmra.mxu0 %v829
    %v865 = vpop.f32.mrf.mxu0
    %v866 = vadd.f32 0.0, %v865
    %v867 = vpop.f32.mrf.mxu0
    %v868 = vpop.f32.mrf.mxu0
    %v869 = vadd.f32 0.0, %v868
    %v870 = vpop.f32.mrf.mxu0
    %871 = vdwg.mxu0
    %v872 = vsel %vm74, %v816, 0.0
    %v873 = vsel %vm74, %v866, 0.0
    %v874 = vadd.f32 %v872, %v873
    %v875 = vsel %vm74, %v819, 0.0
    %v876 = vsel %vm74, %v869, 0.0
    %v877 = vadd.f32 %v875, %v876
    %v878 = vadd.f32 %v68, %v874
    %v879 = vadd.f32 %v69, %v877
    %v880 = vld [vmem:[%s7] sm:$0x1]
    %v882 = vlaneseq
    %v883 = vshrl.u32 %v882, 7
    %v884 = vsub.s32 0, %v883
    %v885 = vrot.slane %v880, %v884
    %v887 = vadd.f32 %v878, %v885
    %v888 = vadd.f32 %v879, %v885
    %v889 = vld [vmem:[%s8] sm:$0x1]
    %v890 = vld [vmem:[%s9] sm:$0x1]
    %v891 = vsel %vm74, %v887, 0.0
    %892 = vadd.xlane.f32.xlu0 %v891
    %v893 = vpop.xlane.xlu0 %892
    %v894 = vsel %vm74, %v888, 0.0
    %895 = vadd.xlane.f32.xlu0 %v894
    %v896 = vpop.xlane.xlu0 %895
    %v897 = vmul.f32 %v893, %v81
    %v898 = vmul.f32 %v896, %v81
    %v899 = vsub.f32 %v887, %v897
    %v900 = vsub.f32 %v888, %v898
    %v901 = vmul.f32 %v899, %v899
    %v902 = vmul.f32 %v900, %v900
    %v903 = vsel %vm74, %v901, 0.0
    %904 = vadd.xlane.f32.xlu0 %v903
    %v905 = vpop.xlane.xlu0 %904
    %v906 = vsel %vm74, %v902, 0.0
    %907 = vadd.xlane.f32.xlu0 %v906
    %v908 = vpop.xlane.xlu0 %907
    %v909 = vmul.f32 %v905, %v81
    %v910 = vmul.f32 %v908, %v81
    %v911 = vadd.f32 %v909, 1e-05
    %v912 = vadd.f32 %v910, 1e-05
    %v913 = vrsqrt.pop %v911
    %v914 = vrsqrt.pop %v912
    %v915 = vmul.f32 %v899, %v913
    %v916 = vmul.f32 %v900, %v914
    %v918 = vlaneseq
    %v919 = vshrl.u32 %v918, 7
    %v920 = vsub.s32 0, %v919
    %v921 = vrot.slane %v889, %v920
    %v923 = vmul.f32 %v915, %v921
    %v924 = vmul.f32 %v916, %v921
    %v926 = vlaneseq
    %v927 = vshrl.u32 %v926, 7
    %v928 = vsub.s32 0, %v927
    %v929 = vrot.slane %v890, %v928
    %v931 = vadd.f32 %v923, %v929
    %v932 = vadd.f32 %v924, %v929
    %v933 = vpack.c.bf16 %v932, %v931
    %v934 = vld [vmem:[%s10] sm:$0xf]
    %v935 = vld [vmem:[%s10 + $0x4] sm:$0xf]
    %v936 = vld [vmem:[%s10 + $0x8] sm:$0xf]
    %v937 = vld [vmem:[%s10 + $0xc] sm:$0xf]
    %v938 = vld [vmem:[%s11] sm:$0x1]
    %v940 = vlaneseq
    %v941 = vshrl.u32 %v940, 7
    %v942 = vsub.s32 0, %v941
    %v943 = vrot.slane %v938, %v942
    %v949 = vunpack.c.l.b16 %v934
    %v950 = vunpack.c.l.b16 %v935
    %v951 = vunpack.c.l.b16 %v936
    %v952 = vunpack.c.l.b16 %v937
    %v953 = vpack.c.b16 %v950, %v949
    %v954 = vpack.c.b16 %v952, %v951
    %v958 = vsel %vm74, %v933, 0
    %960 = vmatprep.subr.bf16.mxu0 0
    %961 = vmatpush1.bf16.msra.mxu0 0
    %962 = vmatprep.subr.bf16.mxu0 0
    %963 = vmatpush1.bf16.msra.mxu0 0
    %964 = vmatprep.subr.bf16.mxu0 0
    %965 = vmatpush1.bf16.msra.mxu0 0
    %966 = vmatprep.subr.bf16.mxu0 0
    %967 = vmatpush1.bf16.msra.mxu0 0
    %968 = vmatprep.subr.bf16.mxu0 0
    %969 = vmatpush1.bf16.msra.mxu0 0
    %970 = vmatprep.subr.bf16.mxu0 0
    %971 = vmatpush1.bf16.msra.mxu0 0
    %972 = vmatprep.subr.bf16.mxu0 0
    %973 = vmatpush1.bf16.msra.mxu0 %v954
    %974 = vmatprep.subr.bf16.mxu0 0
    %975 = vmatpush1.bf16.msra.mxu0 %v953
    %976 = vmatprep.subr.bf16.mxu0 0
    %977 = vmatpush2.bf16.msra.mxu0 0
    %978 = vmatprep.subr.bf16.mxu0 0
    %979 = vmatpush2.bf16.msra.mxu0 0
    %980 = vmatprep.subr.bf16.mxu0 0
    %981 = vmatpush2.bf16.msra.mxu0 0
    %982 = vmatprep.subr.bf16.mxu0 0
    %983 = vmatpush2.bf16.msra.mxu0 0
    %984 = vmatprep.subr.bf16.mxu0 0
    %985 = vmatpush2.bf16.msra.mxu0 0
    %986 = vmatprep.subr.bf16.mxu0 0
    %987 = vmatpush2.bf16.msra.mxu0 0
    %988 = vmatprep.subr.bf16.mxu0 0
    %989 = vmatpush2.bf16.msra.mxu0 0
    %990 = vmatprep.subr.bf16.mxu0 0
    %991 = vmatpush2.bf16.msra.mxu0 0
    %992 = vmatprep.mubr.bf16.mxu0 0
    %993 = vmatmul.mubr.bf16.gmra.mxu0 %v958
    %v994 = vpop.f32.mrf.mxu0
    %v995 = vadd.f32 %v943, %v994
    %v996 = vpop.f32.mrf.mxu0
    %v997 = vpop.f32.mrf.mxu0
    %v998 = vadd.f32 %v943, %v997
    %v999 = vpop.f32.mrf.mxu0
    %1000 = vdwg.mxu0
    %v1001 = vmul.f32 %v995, 0.5
    %v1002 = vmul.f32 %v998, 0.5
    %v1003 = vmul.f32 %v995, 0.044715
    %v1004 = vmul.f32 %v998, 0.044715
    %v1005 = vmul.f32 %v1003, %v995
    %v1006 = vmul.f32 %v1004, %v998
    %v1007 = vmul.f32 %v1005, %v995
    %v1008 = vmul.f32 %v1006, %v998
    %v1009 = vadd.f32 %v995, %v1007
    %v1010 = vadd.f32 %v998, %v1008
    %v1011 = vmul.f32 %v1009, 0.7978846
    %v1012 = vmul.f32 %v1010, 0.7978846
    %v1013 = vtanh.pop %v1011
    %v1014 = vtanh.pop %v1012
    %v1015 = vadd.f32 %v1013, 1.0
    %v1016 = vadd.f32 %v1014, 1.0
    %v1017 = vmul.f32 %v1001, %v1015
    %v1018 = vmul.f32 %v1002, %v1016
    %v1019 = vpack.c.bf16 %v1018, %v1017
    %v1020 = vld [vmem:[%s12] sm:$0xf]
    %v1021 = vld [vmem:[%s12 + $0x4] sm:$0xf]
    %v1022 = vld [vmem:[%s12 + $0x8] sm:$0xf]
    %v1023 = vld [vmem:[%s12 + $0xc] sm:$0xf]
    %v1024 = vld [vmem:[%s12 + $0x10] sm:$0xf]
    %v1025 = vld [vmem:[%s12 + $0x14] sm:$0xf]
    %v1026 = vld [vmem:[%s12 + $0x18] sm:$0xf]
    %v1027 = vld [vmem:[%s12 + $0x1c] sm:$0xf]
    %v1036 = vunpack.c.l.b16 %v1020
    %v1037 = vunpack.c.l.b16 %v1021
    %v1038 = vunpack.c.l.b16 %v1022
    %v1039 = vunpack.c.l.b16 %v1023
    %v1040 = vunpack.c.l.b16 %v1024
    %v1041 = vunpack.c.l.b16 %v1025
    %v1042 = vunpack.c.l.b16 %v1026
    %v1043 = vunpack.c.l.b16 %v1027
    %v1044 = vpack.c.b16 %v1037, %v1036
    %v1045 = vpack.c.b16 %v1039, %v1038
    %v1046 = vpack.c.b16 %v1041, %v1040
    %v1047 = vpack.c.b16 %v1043, %v1042
    %vm1052 = vcmask 523264
    %v1054 = vsel %vm1052, %v1019, 0
    %1056 = vmatprep.subr.bf16.mxu0 0
    %1057 = vmatpush1.bf16.msra.mxu0 0
    %1058 = vmatprep.subr.bf16.mxu0 0
    %1059 = vmatpush1.bf16.msra.mxu0 0
    %1060 = vmatprep.subr.bf16.mxu0 0
    %1061 = vmatpush1.bf16.msra.mxu0 0
    %1062 = vmatprep.subr.bf16.mxu0 0
    %1063 = vmatpush1.bf16.msra.mxu0 0
    %1064 = vmatprep.subr.bf16.mxu0 0
    %1065 = vmatpush1.bf16.msra.mxu0 %v1047
    %1066 = vmatprep.subr.bf16.mxu0 0
    %1067 = vmatpush1.bf16.msra.mxu0 %v1046
    %1068 = vmatprep.subr.bf16.mxu0 0
    %1069 = vmatpush1.bf16.msra.mxu0 %v1045
    %1070 = vmatprep.subr.bf16.mxu0 0
    %1071 = vmatpush1.bf16.msra.mxu0 %v1044
    %1072 = vmatprep.subr.bf16.mxu0 0
    %1073 = vmatpush2.bf16.msra.mxu0 0
    %1074 = vmatprep.subr.bf16.mxu0 0
    %1075 = vmatpush2.bf16.msra.mxu0 0
    %1076 = vmatprep.subr.bf16.mxu0 0
    %1077 = vmatpush2.bf16.msra.mxu0 0
    %1078 = vmatprep.subr.bf16.mxu0 0
    %1079 = vmatpush2.bf16.msra.mxu0 0
    %1080 = vmatprep.subr.bf16.mxu0 0
    %1081 = vmatpush2.bf16.msra.mxu0 0
    %1082 = vmatprep.subr.bf16.mxu0 0
    %1083 = vmatpush2.bf16.msra.mxu0 0
    %1084 = vmatprep.subr.bf16.mxu0 0
    %1085 = vmatpush2.bf16.msra.mxu0 0
    %1086 = vmatprep.subr.bf16.mxu0 0
    %1087 = vmatpush2.bf16.msra.mxu0 0
    %1088 = vmatprep.mubr.bf16.mxu0 0
    %1089 = vmatmul.mubr.bf16.gmra.mxu0 %v1054
    %v1090 = vpop.f32.mrf.mxu0
    %v1091 = vadd.f32 0.0, %v1090
    %v1092 = vpop.f32.mrf.mxu0
    %v1093 = vpop.f32.mrf.mxu0
    %v1094 = vadd.f32 0.0, %v1093
    %v1095 = vpop.f32.mrf.mxu0
    %1096 = vdwg.mxu0
    %v1097 = vadd.f32 %v887, %v1091
    %v1098 = vadd.f32 %v888, %v1094
    %v1099 = vld [vmem:[%s13] sm:$0x1]
    %v1101 = vlaneseq
    %v1102 = vshrl.u32 %v1101, 7
    %v1103 = vsub.s32 0, %v1102
    %v1104 = vrot.slane %v1099, %v1103
    %v1106 = vadd.f32 %v1097, %v1104
    %v1107 = vadd.f32 %v1098, %v1104
    %s1108 = scalar_lea.vmem %s2, 1
    %v1109 = vld [vmem:[%s1108] sm:$0x1]
    %s1110 = scalar_lea.vmem %s3, 1
    %v1111 = vld [vmem:[%s1110] sm:$0x1]
    %v1112 = vsel %vm74, %v1106, 0.0
    %1113 = vadd.xlane.f32.xlu0 %v1112
    %v1114 = vpop.xlane.xlu0 %1113
    %v1115 = vsel %vm74, %v1107, 0.0
    %1116 = vadd.xlane.f32.xlu0 %v1115
    %v1117 = vpop.xlane.xlu0 %1116
    %v1118 = vmul.f32 %v1114, %v81
    %v1119 = vmul.f32 %v1117, %v81
    %v1120 = vsub.f32 %v1106, %v1118
    %v1121 = vsub.f32 %v1107, %v1119
    %v1122 = vmul.f32 %v1120, %v1120
    %v1123 = vmul.f32 %v1121, %v1121
    %v1124 = vsel %vm74, %v1122, 0.0
    %1125 = vadd.xlane.f32.xlu0 %v1124
    %v1126 = vpop.xlane.xlu0 %1125
    %v1127 = vsel %vm74, %v1123, 0.0
    %1128 = vadd.xlane.f32.xlu0 %v1127
    %v1129 = vpop.xlane.xlu0 %1128
    %v1130 = vmul.f32 %v1126, %v81
    %v1131 = vmul.f32 %v1129, %v81
    %v1132 = vadd.f32 %v1130, 1e-05
    %v1133 = vadd.f32 %v1131, 1e-05
    %v1134 = vrsqrt.pop %v1132
    %v1135 = vrsqrt.pop %v1133
    %v1136 = vmul.f32 %v1120, %v1134
    %v1137 = vmul.f32 %v1121, %v1135
    %v1139 = vlaneseq
    %v1140 = vshrl.u32 %v1139, 7
    %v1141 = vsub.s32 0, %v1140
    %v1142 = vrot.slane %v1109, %v1141
    %v1144 = vmul.f32 %v1136, %v1142
    %v1145 = vmul.f32 %v1137, %v1142
    %v1147 = vlaneseq
    %v1148 = vshrl.u32 %v1147, 7
    %v1149 = vsub.s32 0, %v1148
    %v1150 = vrot.slane %v1111, %v1149
    %v1152 = vadd.f32 %v1144, %v1150
    %v1153 = vadd.f32 %v1145, %v1150
    %v1154 = vpack.c.bf16 %v1153, %v1152
    %s1155 = scalar_lea.vmem %s4, 48
    %v1156 = vld [vmem:[%s1155] sm:$0xf]
    %v1157 = vld [vmem:[%s1155 + $0x4] sm:$0xf]
    %v1158 = vld [vmem:[%s1155 + $0x8] sm:$0xf]
    %v1159 = vld [vmem:[%s1155 + $0xc] sm:$0xf]
    %v1160 = vld [vmem:[%s1155 + $0x10] sm:$0xf]
    %v1161 = vld [vmem:[%s1155 + $0x14] sm:$0xf]
    %v1162 = vld [vmem:[%s1155 + $0x18] sm:$0xf]
    %v1163 = vld [vmem:[%s1155 + $0x1c] sm:$0xf]
    %v1164 = vld [vmem:[%s1155 + $0x20] sm:$0xf]
    %v1165 = vld [vmem:[%s1155 + $0x24] sm:$0xf]
    %v1166 = vld [vmem:[%s1155 + $0x28] sm:$0xf]
    %v1167 = vld [vmem:[%s1155 + $0x2c] sm:$0xf]
    %s1168 = scalar_lea.vmem %s5, 96
    %v1169 = vld [vmem:[%s1168] sm:$0xff]
    %v1170 = vld [vmem:[%s1168 + $0x8] sm:$0xff]
    %v1171 = vld [vmem:[%s1168 + $0x10] sm:$0xff]
    %v1172 = vld [vmem:[%s1168 + $0x18] sm:$0xff]
    %v1173 = vld [vmem:[%s1168 + $0x20] sm:$0xff]
    %v1174 = vld [vmem:[%s1168 + $0x28] sm:$0xff]
    %v1175 = vld [vmem:[%s1168 + $0x30] sm:$0xff]
    %v1176 = vld [vmem:[%s1168 + $0x38] sm:$0xff]
    %v1177 = vld [vmem:[%s1168 + $0x40] sm:$0xff]
    %v1178 = vld [vmem:[%s1168 + $0x48] sm:$0xff]
    %v1179 = vld [vmem:[%s1168 + $0x50] sm:$0xff]
    %v1180 = vld [vmem:[%s1168 + $0x58] sm:$0xff]
    %1182 = vset.pattern.permute.xlu0 0
    %1183 = vperm.xlu0 %1182, %v1169
    %v1184 = vpop.permute.xlu0 %1183
    %1187 = vset.pattern.permute.xlu0 0
    %1188 = vperm.xlu0 %1187, %v1170
    %v1189 = vpop.permute.xlu0 %1188
    %1192 = vset.pattern.permute.xlu0 0
    %1193 = vperm.xlu0 %1192, %v1171
    %v1194 = vpop.permute.xlu0 %1193
    %1197 = vset.pattern.permute.xlu0 0
    %1198 = vperm.xlu0 %1197, %v1172
    %v1199 = vpop.permute.xlu0 %1198
    %1202 = vset.pattern.permute.xlu0 0
    %1203 = vperm.xlu0 %1202, %v1173
    %v1204 = vpop.permute.xlu0 %1203
    %1207 = vset.pattern.permute.xlu0 0
    %1208 = vperm.xlu0 %1207, %v1174
    %v1209 = vpop.permute.xlu0 %1208
    %1212 = vset.pattern.permute.xlu0 0
    %1213 = vperm.xlu0 %1212, %v1175
    %v1214 = vpop.permute.xlu0 %1213
    %1217 = vset.pattern.permute.xlu0 0
    %1218 = vperm.xlu0 %1217, %v1176
    %v1219 = vpop.permute.xlu0 %1218
    %1222 = vset.pattern.permute.xlu0 0
    %1223 = vperm.xlu0 %1222, %v1177
    %v1224 = vpop.permute.xlu0 %1223
    %1227 = vset.pattern.permute.xlu0 0
    %1228 = vperm.xlu0 %1227, %v1178
    %v1229 = vpop.permute.xlu0 %1228
    %1232 = vset.pattern.permute.xlu0 0
    %1233 = vperm.xlu0 %1232, %v1179
    %v1234 = vpop.permute.xlu0 %1233
    %1237 = vset.pattern.permute.xlu0 0
    %1238 = vperm.xlu0 %1237, %v1180
    %v1239 = vpop.permute.xlu0 %1238
    %v1253 = vunpack.c.l.b16 %v1156
    %v1254 = vunpack.c.l.b16 %v1157
    %v1255 = vunpack.c.l.b16 %v1158
    %v1256 = vunpack.c.l.b16 %v1159
    %v1257 = vunpack.c.l.b16 %v1160
    %v1258 = vunpack.c.l.b16 %v1161
    %v1259 = vunpack.c.l.b16 %v1162
    %v1260 = vunpack.c.l.b16 %v1163
    %v1261 = vunpack.c.l.b16 %v1164
    %v1262 = vunpack.c.l.b16 %v1165
    %v1263 = vunpack.c.l.b16 %v1166
    %v1264 = vunpack.c.l.b16 %v1167
    %v1265 = vpack.c.b16 %v1254, %v1253
    %v1266 = vpack.c.b16 %v1256, %v1255
    %v1267 = vpack.c.b16 %v1258, %v1257
    %v1268 = vpack.c.b16 %v1260, %v1259
    %v1269 = vpack.c.b16 %v1262, %v1261
    %v1270 = vpack.c.b16 %v1264, %v1263
    %v1272 = vsel %vm74, %v1265, 0
    %v1275 = vsel %vm74, %v1266, 0
    %v1278 = vsel %vm74, %v1267, 0
    %v1281 = vsel %vm74, %v1268, 0
    %v1284 = vsel %vm74, %v1269, 0
    %v1287 = vsel %vm74, %v1270, 0
    %v1290 = vsel %vm74, %v1154, 0
    %1292 = vmatprep.subr.bf16.mxu0 0
    %1293 = vmatpush1.bf16.xpose.msra.mxu0 0
    %1294 = vmatprep.subr.bf16.mxu0 0
    %1295 = vmatpush1.bf16.xpose.msra.mxu0 0
    %1296 = vmatprep.subr.bf16.mxu0 0
    %1297 = vmatpush1.bf16.xpose.msra.mxu0 0
    %1298 = vmatprep.subr.bf16.mxu0 0
    %1299 = vmatpush1.bf16.xpose.msra.mxu0 0
    %1300 = vmatprep.subr.bf16.mxu0 0
    %1301 = vmatpush1.bf16.xpose.msra.mxu0 0
    %1302 = vmatprep.subr.bf16.mxu0 0
    %1303 = vmatpush1.bf16.xpose.msra.mxu0 0
    %1304 = vmatprep.subr.bf16.mxu0 0
    %1305 = vmatpush1.bf16.xpose.msra.mxu0 0
    %1306 = vmatprep.subr.bf16.mxu0 0
    %1307 = vmatpush1.bf16.xpose.msra.mxu0 %v1290
    %1308 = vmatprep.subr.bf16.mxu0 0
    %1309 = vmatpush2.bf16.xpose.msra.mxu0 0
    %1310 = vmatprep.subr.bf16.mxu0 0
    %1311 = vmatpush2.bf16.xpose.msra.mxu0 0
    %1312 = vmatprep.subr.bf16.mxu0 0
    %1313 = vmatpush2.bf16.xpose.msra.mxu0 0
    %1314 = vmatprep.subr.bf16.mxu0 0
    %1315 = vmatpush2.bf16.xpose.msra.mxu0 0
    %1316 = vmatprep.subr.bf16.mxu0 0
    %1317 = vmatpush2.bf16.xpose.msra.mxu0 0
    %1318 = vmatprep.subr.bf16.mxu0 0
    %1319 = vmatpush2.bf16.xpose.msra.mxu0 0
    %1320 = vmatprep.subr.bf16.mxu0 0
    %1321 = vmatpush2.bf16.xpose.msra.mxu0 0
    %1322 = vmatprep.subr.bf16.mxu0 0
    %1323 = vmatpush2.bf16.xpose.msra.mxu0 0
    %1324 = vmatprep.mubr.bf16.mxu0 0
    %1325 = vmatmul.mubr.bf16.gmra.mxu0 %v1272
    %v1326 = vpop.f32.mrf.mxu0
    %v1327 = vadd.f32 %v1184, %v1326
    %v1328 = vpop.f32.mrf.mxu0
    %v1329 = vpop.f32.mrf.mxu0
    %v1330 = vadd.f32 %v1189, %v1329
    %v1331 = vpop.f32.mrf.mxu0
    %1332 = vmatprep.mubr.bf16.mxu0 0
    %1333 = vmatmul.mubr.bf16.gmra.mxu0 %v1275
    %v1334 = vpop.f32.mrf.mxu0
    %v1335 = vadd.f32 %v1194, %v1334
    %v1336 = vpop.f32.mrf.mxu0
    %v1337 = vpop.f32.mrf.mxu0
    %v1338 = vadd.f32 %v1199, %v1337
    %v1339 = vpop.f32.mrf.mxu0
    %1340 = vmatprep.mubr.bf16.mxu0 0
    %1341 = vmatmul.mubr.bf16.gmra.mxu0 %v1278
    %v1342 = vpop.f32.mrf.mxu0
    %v1343 = vadd.f32 %v1204, %v1342
    %v1344 = vpop.f32.mrf.mxu0
    %v1345 = vpop.f32.mrf.mxu0
    %v1346 = vadd.f32 %v1209, %v1345
    %v1347 = vpop.f32.mrf.mxu0
    %1348 = vmatprep.mubr.bf16.mxu0 0
    %1349 = vmatmul.mubr.bf16.gmra.mxu0 %v1281
    %v1350 = vpop.f32.mrf.mxu0
    %v1351 = vadd.f32 %v1214, %v1350
    %v1352 = vpop.f32.mrf.mxu0
    %v1353 = vpop.f32.mrf.mxu0
    %v1354 = vadd.f32 %v1219, %v1353
    %v1355 = vpop.f32.mrf.mxu0
    %1356 = vmatprep.mubr.bf16.mxu0 0
    %1357 = vmatmul.mubr.bf16.gmra.mxu0 %v1284
    %v1358 = vpop.f32.mrf.mxu0
    %v1359 = vadd.f32 %v1224, %v1358
    %v1360 = vpop.f32.mrf.mxu0
    %v1361 = vpop.f32.mrf.mxu0
    %v1362 = vadd.f32 %v1229, %v1361
    %v1363 = vpop.f32.mrf.mxu0
    %1364 = vmatprep.mubr.bf16.mxu0 0
    %1365 = vmatmul.mubr.bf16.gmra.mxu0 %v1287
    %v1366 = vpop.f32.mrf.mxu0
    %v1367 = vadd.f32 %v1234, %v1366
    %v1368 = vpop.f32.mrf.mxu0
    %v1369 = vpop.f32.mrf.mxu0
    %v1370 = vadd.f32 %v1239, %v1369
    %v1371 = vpop.f32.mrf.mxu0
    %1372 = vdwg.mxu0
    %1373 = vxpose.xlu0.b32.start [1/16] %v1327, 128
    %1374 = vxpose.xlu0.b32.cont [2/16] %v1330, 128
    %1375 = vxpose.xlu0.b32.cont [3/16] 0.0, 128
    %1376 = vxpose.xlu0.b32.cont [4/16] 0.0, 128
    %1377 = vxpose.xlu0.b32.cont [5/16] 0.0, 128
    %1378 = vxpose.xlu0.b32.cont [6/16] 0.0, 128
    %1379 = vxpose.xlu0.b32.cont [7/16] 0.0, 128
    %1380 = vxpose.xlu0.b32.cont [8/16] 0.0, 128
    %1381 = vxpose.xlu0.b32.cont [9/16] 0.0, 128
    %1382 = vxpose.xlu0.b32.cont [10/16] 0.0, 128
    %1383 = vxpose.xlu0.b32.cont [11/16] 0.0, 128
    %1384 = vxpose.xlu0.b32.cont [12/16] 0.0, 128
    %1385 = vxpose.xlu0.b32.cont [13/16] 0.0, 128
    %1386 = vxpose.xlu0.b32.cont [14/16] 0.0, 128
    %1387 = vxpose.xlu0.b32.cont [15/16] 0.0, 128
    %1388 = vxpose.xlu0.b32.end [16/16] 0.0, 128
    %v1389 = vpop.trf.xlu0
    %v1390 = vpop.trf.xlu0
    %v1391 = vpop.trf.xlu0
    %v1392 = vpop.trf.xlu0
    %v1393 = vpop.trf.xlu0
    %v1394 = vpop.trf.xlu0
    %v1395 = vpop.trf.xlu0
    %v1396 = vpop.trf.xlu0
    %v1397 = vpop.trf.xlu0
    %v1398 = vpop.trf.xlu0
    %v1399 = vpop.trf.xlu0
    %v1400 = vpop.trf.xlu0
    %v1401 = vpop.trf.xlu0
    %v1402 = vpop.trf.xlu0
    %v1403 = vpop.trf.xlu0
    %v1404 = vpop.trf.xlu0
    %1405 = vxpose.xlu0.b32.start [1/16] %v1335, 128
    %1406 = vxpose.xlu0.b32.cont [2/16] %v1338, 128
    %1407 = vxpose.xlu0.b32.cont [3/16] 0.0, 128
    %1408 = vxpose.xlu0.b32.cont [4/16] 0.0, 128
    %1409 = vxpose.xlu0.b32.cont [5/16] 0.0, 128
    %1410 = vxpose.xlu0.b32.cont [6/16] 0.0, 128
    %1411 = vxpose.xlu0.b32.cont [7/16] 0.0, 128
    %1412 = vxpose.xlu0.b32.cont [8/16] 0.0, 128
    %1413 = vxpose.xlu0.b32.cont [9/16] 0.0, 128
    %1414 = vxpose.xlu0.b32.cont [10/16] 0.0, 128
    %1415 = vxpose.xlu0.b32.cont [11/16] 0.0, 128
    %1416 = vxpose.xlu0.b32.cont [12/16] 0.0, 128
    %1417 = vxpose.xlu0.b32.cont [13/16] 0.0, 128
    %1418 = vxpose.xlu0.b32.cont [14/16] 0.0, 128
    %1419 = vxpose.xlu0.b32.cont [15/16] 0.0, 128
    %1420 = vxpose.xlu0.b32.end [16/16] 0.0, 128
    %v1421 = vpop.trf.xlu0
    %v1422 = vpop.trf.xlu0
    %v1423 = vpop.trf.xlu0
    %v1424 = vpop.trf.xlu0
    %v1425 = vpop.trf.xlu0
    %v1426 = vpop.trf.xlu0
    %v1427 = vpop.trf.xlu0
    %v1428 = vpop.trf.xlu0
    %v1429 = vpop.trf.xlu0
    %v1430 = vpop.trf.xlu0
    %v1431 = vpop.trf.xlu0
    %v1432 = vpop.trf.xlu0
    %v1433 = vpop.trf.xlu0
    %v1434 = vpop.trf.xlu0
    %v1435 = vpop.trf.xlu0
    %v1436 = vpop.trf.xlu0
    %1437 = vxpose.xlu0.b32.start [1/16] %v1343, 128
    %1438 = vxpose.xlu0.b32.cont [2/16] %v1346, 128
    %1439 = vxpose.xlu0.b32.cont [3/16] 0.0, 128
    %1440 = vxpose.xlu0.b32.cont [4/16] 0.0, 128
    %1441 = vxpose.xlu0.b32.cont [5/16] 0.0, 128
    %1442 = vxpose.xlu0.b32.cont [6/16] 0.0, 128
    %1443 = vxpose.xlu0.b32.cont [7/16] 0.0, 128
    %1444 = vxpose.xlu0.b32.cont [8/16] 0.0, 128
    %1445 = vxpose.xlu0.b32.cont [9/16] 0.0, 128
    %1446 = vxpose.xlu0.b32.cont [10/16] 0.0, 128
    %1447 = vxpose.xlu0.b32.cont [11/16] 0.0, 128
    %1448 = vxpose.xlu0.b32.cont [12/16] 0.0, 128
    %1449 = vxpose.xlu0.b32.cont [13/16] 0.0, 128
    %1450 = vxpose.xlu0.b32.cont [14/16] 0.0, 128
    %1451 = vxpose.xlu0.b32.cont [15/16] 0.0, 128
    %1452 = vxpose.xlu0.b32.end [16/16] 0.0, 128
    %v1453 = vpop.trf.xlu0
    %v1454 = vpop.trf.xlu0
    %v1455 = vpop.trf.xlu0
    %v1456 = vpop.trf.xlu0
    %v1457 = vpop.trf.xlu0
    %v1458 = vpop.trf.xlu0
    %v1459 = vpop.trf.xlu0
    %v1460 = vpop.trf.xlu0
    %v1461 = vpop.trf.xlu0
    %v1462 = vpop.trf.xlu0
    %v1463 = vpop.trf.xlu0
    %v1464 = vpop.trf.xlu0
    %v1465 = vpop.trf.xlu0
    %v1466 = vpop.trf.xlu0
    %v1467 = vpop.trf.xlu0
    %v1468 = vpop.trf.xlu0
    %1469 = vxpose.xlu0.b32.start [1/16] %v1351, 128
    %1470 = vxpose.xlu0.b32.cont [2/16] %v1354, 128
    %1471 = vxpose.xlu0.b32.cont [3/16] 0.0, 128
    %1472 = vxpose.xlu0.b32.cont [4/16] 0.0, 128
    %1473 = vxpose.xlu0.b32.cont [5/16] 0.0, 128
    %1474 = vxpose.xlu0.b32.cont [6/16] 0.0, 128
    %1475 = vxpose.xlu0.b32.cont [7/16] 0.0, 128
    %1476 = vxpose.xlu0.b32.cont [8/16] 0.0, 128
    %1477 = vxpose.xlu0.b32.cont [9/16] 0.0, 128
    %1478 = vxpose.xlu0.b32.cont [10/16] 0.0, 128
    %1479 = vxpose.xlu0.b32.cont [11/16] 0.0, 128
    %1480 = vxpose.xlu0.b32.cont [12/16] 0.0, 128
    %1481 = vxpose.xlu0.b32.cont [13/16] 0.0, 128
    %1482 = vxpose.xlu0.b32.cont [14/16] 0.0, 128
    %1483 = vxpose.xlu0.b32.cont [15/16] 0.0, 128
    %1484 = vxpose.xlu0.b32.end [16/16] 0.0, 128
    %v1485 = vpop.trf.xlu0
    %v1486 = vpop.trf.xlu0
    %v1487 = vpop.trf.xlu0
    %v1488 = vpop.trf.xlu0
    %v1489 = vpop.trf.xlu0
    %v1490 = vpop.trf.xlu0
    %v1491 = vpop.trf.xlu0
    %v1492 = vpop.trf.xlu0
    %v1493 = vpop.trf.xlu0
    %v1494 = vpop.trf.xlu0
    %v1495 = vpop.trf.xlu0
    %v1496 = vpop.trf.xlu0
    %v1497 = vpop.trf.xlu0
    %v1498 = vpop.trf.xlu0
    %v1499 = vpop.trf.xlu0
    %v1500 = vpop.trf.xlu0
    %1501 = vxpose.xlu0.b32.start [1/16] %v1359, 128
    %1502 = vxpose.xlu0.b32.cont [2/16] %v1362, 128
    %1503 = vxpose.xlu0.b32.cont [3/16] 0.0, 128
    %1504 = vxpose.xlu0.b32.cont [4/16] 0.0, 128
    %1505 = vxpose.xlu0.b32.cont [5/16] 0.0, 128
    %1506 = vxpose.xlu0.b32.cont [6/16] 0.0, 128
    %1507 = vxpose.xlu0.b32.cont [7/16] 0.0, 128
    %1508 = vxpose.xlu0.b32.cont [8/16] 0.0, 128
    %1509 = vxpose.xlu0.b32.cont [9/16] 0.0, 128
    %1510 = vxpose.xlu0.b32.cont [10/16] 0.0, 128
    %1511 = vxpose.xlu0.b32.cont [11/16] 0.0, 128
    %1512 = vxpose.xlu0.b32.cont [12/16] 0.0, 128
    %1513 = vxpose.xlu0.b32.cont [13/16] 0.0, 128
    %1514 = vxpose.xlu0.b32.cont [14/16] 0.0, 128
    %1515 = vxpose.xlu0.b32.cont [15/16] 0.0, 128
    %1516 = vxpose.xlu0.b32.end [16/16] 0.0, 128
    %v1517 = vpop.trf.xlu0
    %v1518 = vpop.trf.xlu0
    %v1519 = vpop.trf.xlu0
    %v1520 = vpop.trf.xlu0
    %v1521 = vpop.trf.xlu0
    %v1522 = vpop.trf.xlu0
    %v1523 = vpop.trf.xlu0
    %v1524 = vpop.trf.xlu0
    %v1525 = vpop.trf.xlu0
    %v1526 = vpop.trf.xlu0
    %v1527 = vpop.trf.xlu0
    %v1528 = vpop.trf.xlu0
    %v1529 = vpop.trf.xlu0
    %v1530 = vpop.trf.xlu0
    %v1531 = vpop.trf.xlu0
    %v1532 = vpop.trf.xlu0
    %1533 = vxpose.xlu0.b32.start [1/16] %v1367, 128
    %1534 = vxpose.xlu0.b32.cont [2/16] %v1370, 128
    %1535 = vxpose.xlu0.b32.cont [3/16] 0.0, 128
    %1536 = vxpose.xlu0.b32.cont [4/16] 0.0, 128
    %1537 = vxpose.xlu0.b32.cont [5/16] 0.0, 128
    %1538 = vxpose.xlu0.b32.cont [6/16] 0.0, 128
    %1539 = vxpose.xlu0.b32.cont [7/16] 0.0, 128
    %1540 = vxpose.xlu0.b32.cont [8/16] 0.0, 128
    %1541 = vxpose.xlu0.b32.cont [9/16] 0.0, 128
    %1542 = vxpose.xlu0.b32.cont [10/16] 0.0, 128
    %1543 = vxpose.xlu0.b32.cont [11/16] 0.0, 128
    %1544 = vxpose.xlu0.b32.cont [12/16] 0.0, 128
    %1545 = vxpose.xlu0.b32.cont [13/16] 0.0, 128
    %1546 = vxpose.xlu0.b32.cont [14/16] 0.0, 128
    %1547 = vxpose.xlu0.b32.cont [15/16] 0.0, 128
    %1548 = vxpose.xlu0.b32.end [16/16] 0.0, 128
    %v1549 = vpop.trf.xlu0
    %v1550 = vpop.trf.xlu0
    %v1551 = vpop.trf.xlu0
    %v1552 = vpop.trf.xlu0
    %v1553 = vpop.trf.xlu0
    %v1554 = vpop.trf.xlu0
    %v1555 = vpop.trf.xlu0
    %v1556 = vpop.trf.xlu0
    %v1557 = vpop.trf.xlu0
    %v1558 = vpop.trf.xlu0
    %v1559 = vpop.trf.xlu0
    %v1560 = vpop.trf.xlu0
    %v1561 = vpop.trf.xlu0
    %v1562 = vpop.trf.xlu0
    %v1563 = vpop.trf.xlu0
    %v1564 = vpop.trf.xlu0
    %v1565 = vmul.f32 %v1389, 0.25
    %v1566 = vmul.f32 %v1390, 0.25
    %v1567 = vmul.f32 %v1421, 0.25
    %v1568 = vmul.f32 %v1422, 0.25
    %v1569 = vpack.c.bf16 %v1566, %v1565
    %v1570 = vpack.c.bf16 %v1568, %v1567
    %v1571 = vpack.c.bf16 %v1454, %v1453
    %v1572 = vpack.c.bf16 %v1486, %v1485
    %v1573 = vpack.c.bf16 %v1518, %v1517
    %v1574 = vpack.c.bf16 %v1550, %v1549
    %v1576 = vsel %vm537, %v1569, 0
    %v1579 = vsel %vm537, %v1571, 0
    %1581 = vmatprep.subr.bf16.mxu0 0
    %1582 = vmatpush1.bf16.xpose.msra.mxu0 0
    %1583 = vmatprep.subr.bf16.mxu0 0
    %1584 = vmatpush1.bf16.xpose.msra.mxu0 0
    %1585 = vmatprep.subr.bf16.mxu0 0
    %1586 = vmatpush1.bf16.xpose.msra.mxu0 0
    %1587 = vmatprep.subr.bf16.mxu0 0
    %1588 = vmatpush1.bf16.xpose.msra.mxu0 0
    %1589 = vmatprep.subr.bf16.mxu0 0
    %1590 = vmatpush1.bf16.xpose.msra.mxu0 0
    %1591 = vmatprep.subr.bf16.mxu0 0
    %1592 = vmatpush1.bf16.xpose.msra.mxu0 0
    %1593 = vmatprep.subr.bf16.mxu0 0
    %1594 = vmatpush1.bf16.xpose.msra.mxu0 0
    %1595 = vmatprep.subr.bf16.mxu0 0
    %1596 = vmatpush1.bf16.xpose.msra.mxu0 %v1579
    %1597 = vmatprep.subr.bf16.mxu0 0
    %1598 = vmatpush2.bf16.xpose.msra.mxu0 0
    %1599 = vmatprep.subr.bf16.mxu0 0
    %1600 = vmatpush2.bf16.xpose.msra.mxu0 0
    %1601 = vmatprep.subr.bf16.mxu0 0
    %1602 = vmatpush2.bf16.xpose.msra.mxu0 0
    %1603 = vmatprep.subr.bf16.mxu0 0
    %1604 = vmatpush2.bf16.xpose.msra.mxu0 0
    %1605 = vmatprep.subr.bf16.mxu0 0
    %1606 = vmatpush2.bf16.xpose.msra.mxu0 0
    %1607 = vmatprep.subr.bf16.mxu0 0
    %1608 = vmatpush2.bf16.xpose.msra.mxu0 0
    %1609 = vmatprep.subr.bf16.mxu0 0
    %1610 = vmatpush2.bf16.xpose.msra.mxu0 0
    %1611 = vmatprep.subr.bf16.mxu0 0
    %1612 = vmatpush2.bf16.xpose.msra.mxu0 0
    %1613 = vmatprep.mubr.bf16.mxu0 0
    %1614 = vmatmul.mubr.bf16.gmra.mxu0 %v1576
    %v1615 = vpop.f32.mrf.mxu0
    %v1616 = vadd.f32 %v70, %v1615
    %v1617 = vpop.f32.mrf.mxu0
    %v1618 = vpop.f32.mrf.mxu0
    %v1619 = vadd.f32 %v71, %v1618
    %v1620 = vpop.f32.mrf.mxu0
    %1621 = vdwg.mxu0
    %v1623 = vsel %vm537, %v1570, 0
    %v1626 = vsel %vm537, %v1572, 0
    %1628 = vmatprep.subr.bf16.mxu0 0
    %1629 = vmatpush1.bf16.xpose.msra.mxu0 0
    %1630 = vmatprep.subr.bf16.mxu0 0
    %1631 = vmatpush1.bf16.xpose.msra.mxu0 0
    %1632 = vmatprep.subr.bf16.mxu0 0
    %1633 = vmatpush1.bf16.xpose.msra.mxu0 0
    %1634 = vmatprep.subr.bf16.mxu0 0
    %1635 = vmatpush1.bf16.xpose.msra.mxu0 0
    %1636 = vmatprep.subr.bf16.mxu0 0
    %1637 = vmatpush1.bf16.xpose.msra.mxu0 0
    %1638 = vmatprep.subr.bf16.mxu0 0
    %1639 = vmatpush1.bf16.xpose.msra.mxu0 0
    %1640 = vmatprep.subr.bf16.mxu0 0
    %1641 = vmatpush1.bf16.xpose.msra.mxu0 0
    %1642 = vmatprep.subr.bf16.mxu0 0
    %1643 = vmatpush1.bf16.xpose.msra.mxu0 %v1626
    %1644 = vmatprep.subr.bf16.mxu0 0
    %1645 = vmatpush2.bf16.xpose.msra.mxu0 0
    %1646 = vmatprep.subr.bf16.mxu0 0
    %1647 = vmatpush2.bf16.xpose.msra.mxu0 0
    %1648 = vmatprep.subr.bf16.mxu0 0
    %1649 = vmatpush2.bf16.xpose.msra.mxu0 0
    %1650 = vmatprep.subr.bf16.mxu0 0
    %1651 = vmatpush2.bf16.xpose.msra.mxu0 0
    %1652 = vmatprep.subr.bf16.mxu0 0
    %1653 = vmatpush2.bf16.xpose.msra.mxu0 0
    %1654 = vmatprep.subr.bf16.mxu0 0
    %1655 = vmatpush2.bf16.xpose.msra.mxu0 0
    %1656 = vmatprep.subr.bf16.mxu0 0
    %1657 = vmatpush2.bf16.xpose.msra.mxu0 0
    %1658 = vmatprep.subr.bf16.mxu0 0
    %1659 = vmatpush2.bf16.xpose.msra.mxu0 0
    %1660 = vmatprep.mubr.bf16.mxu0 0
    %1661 = vmatmul.mubr.bf16.gmra.mxu0 %v1623
    %v1662 = vpop.f32.mrf.mxu0
    %v1663 = vadd.f32 %v70, %v1662
    %v1664 = vpop.f32.mrf.mxu0
    %v1665 = vpop.f32.mrf.mxu0
    %v1666 = vadd.f32 %v71, %v1665
    %v1667 = vpop.f32.mrf.mxu0
    %1668 = vdwg.mxu0
    %v1669 = vsel %vm537, %v1616, -inf
    %1670 = vmax.xlane.f32.xlu0 %v1669
    %v1671 = vpop.xlane.xlu0 %1670
    %v1672 = vsel %vm537, %v1619, -inf
    %1673 = vmax.xlane.f32.xlu0 %v1672
    %v1674 = vpop.xlane.xlu0 %1673
    %v1675 = vsel %vm537, %v1663, -inf
    %1676 = vmax.xlane.f32.xlu0 %v1675
    %v1677 = vpop.xlane.xlu0 %1676
    %v1678 = vsel %vm537, %v1666, -inf
    %1679 = vmax.xlane.f32.xlu0 %v1678
    %v1680 = vpop.xlane.xlu0 %1679
    %v1681 = vsub.f32 %v1616, %v1671
    %v1682 = vsub.f32 %v1619, %v1674
    %v1683 = vsub.f32 %v1663, %v1677
    %v1684 = vsub.f32 %v1666, %v1680
    %v1685 = vmul.f32 %v1681, 1.442695
    %v1686 = vpow.pop %v1685
    %v1687 = vmul.f32 %v1682, 1.442695
    %v1688 = vpow.pop %v1687
    %v1689 = vmul.f32 %v1683, 1.442695
    %v1690 = vpow.pop %v1689
    %v1691 = vmul.f32 %v1684, 1.442695
    %v1692 = vpow.pop %v1691
    %v1693 = vsel %vm537, %v1686, 0.0
    %1694 = vadd.xlane.f32.xlu0 %v1693
    %v1695 = vpop.xlane.xlu0 %1694
    %v1696 = vsel %vm537, %v1688, 0.0
    %1697 = vadd.xlane.f32.xlu0 %v1696
    %v1698 = vpop.xlane.xlu0 %1697
    %v1699 = vsel %vm537, %v1690, 0.0
    %1700 = vadd.xlane.f32.xlu0 %v1699
    %v1701 = vpop.xlane.xlu0 %1700
    %v1702 = vsel %vm537, %v1692, 0.0
    %1703 = vadd.xlane.f32.xlu0 %v1702
    %v1704 = vpop.xlane.xlu0 %1703
    %v1705 = vrcp.pop %v1695
    %v1706 = vrcp.pop %v1698
    %v1707 = vrcp.pop %v1701
    %v1708 = vrcp.pop %v1704
    %v1709 = vmul.f32 %v1686, %v1705
    %v1710 = vmul.f32 %v1688, %v1706
    %v1711 = vmul.f32 %v1690, %v1707
    %v1712 = vmul.f32 %v1692, %v1708
    %v1713 = vpack.c.bf16 %v1710, %v1709
    %v1714 = vpack.c.bf16 %v1712, %v1711
    %v1716 = vsel %vm537, %v1713, 0
    %1718 = vmatprep.subr.bf16.mxu0 0
    %1719 = vmatpush1.bf16.msra.mxu0 0
    %1720 = vmatprep.subr.bf16.mxu0 0
    %1721 = vmatpush1.bf16.msra.mxu0 0
    %1722 = vmatprep.subr.bf16.mxu0 0
    %1723 = vmatpush1.bf16.msra.mxu0 0
    %1724 = vmatprep.subr.bf16.mxu0 0
    %1725 = vmatpush1.bf16.msra.mxu0 0
    %1726 = vmatprep.subr.bf16.mxu0 0
    %1727 = vmatpush1.bf16.msra.mxu0 0
    %1728 = vmatprep.subr.bf16.mxu0 0
    %1729 = vmatpush1.bf16.msra.mxu0 0
    %1730 = vmatprep.subr.bf16.mxu0 0
    %1731 = vmatpush1.bf16.msra.mxu0 0
    %1732 = vmatprep.subr.bf16.mxu0 0
    %1733 = vmatpush1.bf16.msra.mxu0 %v1573
    %1734 = vmatprep.subr.bf16.mxu0 0
    %1735 = vmatpush2.bf16.msra.mxu0 0
    %1736 = vmatprep.subr.bf16.mxu0 0
    %1737 = vmatpush2.bf16.msra.mxu0 0
    %1738 = vmatprep.subr.bf16.mxu0 0
    %1739 = vmatpush2.bf16.msra.mxu0 0
    %1740 = vmatprep.subr.bf16.mxu0 0
    %1741 = vmatpush2.bf16.msra.mxu0 0
    %1742 = vmatprep.subr.bf16.mxu0 0
    %1743 = vmatpush2.bf16.msra.mxu0 0
    %1744 = vmatprep.subr.bf16.mxu0 0
    %1745 = vmatpush2.bf16.msra.mxu0 0
    %1746 = vmatprep.subr.bf16.mxu0 0
    %1747 = vmatpush2.bf16.msra.mxu0 0
    %1748 = vmatprep.subr.bf16.mxu0 0
    %1749 = vmatpush2.bf16.msra.mxu0 0
    %1750 = vmatprep.mubr.bf16.mxu0 0
    %1751 = vmatmul.mubr.bf16.gmra.mxu0 %v1716
    %v1752 = vpop.f32.mrf.mxu0
    %v1753 = vadd.f32 0.0, %v1752
    %v1754 = vpop.f32.mrf.mxu0
    %v1755 = vpop.f32.mrf.mxu0
    %v1756 = vadd.f32 0.0, %v1755
    %v1757 = vpop.f32.mrf.mxu0
    %1758 = vdwg.mxu0
    %v1760 = vsel %vm537, %v1714, 0
    %1762 = vmatprep.subr.bf16.mxu0 0
    %1763 = vmatpush1.bf16.msra.mxu0 0
    %1764 = vmatprep.subr.bf16.mxu0 0
    %1765 = vmatpush1.bf16.msra.mxu0 0
    %1766 = vmatprep.subr.bf16.mxu0 0
    %1767 = vmatpush1.bf16.msra.mxu0 0
    %1768 = vmatprep.subr.bf16.mxu0 0
    %1769 = vmatpush1.bf16.msra.mxu0 0
    %1770 = vmatprep.subr.bf16.mxu0 0
    %1771 = vmatpush1.bf16.msra.mxu0 0
    %1772 = vmatprep.subr.bf16.mxu0 0
    %1773 = vmatpush1.bf16.msra.mxu0 0
    %1774 = vmatprep.subr.bf16.mxu0 0
    %1775 = vmatpush1.bf16.msra.mxu0 0
    %1776 = vmatprep.subr.bf16.mxu0 0
    %1777 = vmatpush1.bf16.msra.mxu0 %v1574
    %1778 = vmatprep.subr.bf16.mxu0 0
    %1779 = vmatpush2.bf16.msra.mxu0 0
    %1780 = vmatprep.subr.bf16.mxu0 0
    %1781 = vmatpush2.bf16.msra.mxu0 0
    %1782 = vmatprep.subr.bf16.mxu0 0
    %1783 = vmatpush2.bf16.msra.mxu0 0
    %1784 = vmatprep.subr.bf16.mxu0 0
    %1785 = vmatpush2.bf16.msra.mxu0 0
    %1786 = vmatprep.subr.bf16.mxu0 0
    %1787 = vmatpush2.bf16.msra.mxu0 0
    %1788 = vmatprep.subr.bf16.mxu0 0
    %1789 = vmatpush2.bf16.msra.mxu0 0
    %1790 = vmatprep.subr.bf16.mxu0 0
    %1791 = vmatpush2.bf16.msra.mxu0 0
    %1792 = vmatprep.subr.bf16.mxu0 0
    %1793 = vmatpush2.bf16.msra.mxu0 0
    %1794 = vmatprep.mubr.bf16.mxu0 0
    %1795 = vmatmul.mubr.bf16.gmra.mxu0 %v1760
    %v1796 = vpop.f32.mrf.mxu0
    %v1797 = vadd.f32 0.0, %v1796
    %v1798 = vpop.f32.mrf.mxu0
    %v1799 = vpop.f32.mrf.mxu0
    %v1800 = vadd.f32 0.0, %v1799
    %v1801 = vpop.f32.mrf.mxu0
    %1802 = vdwg.mxu0
    %v1803 = vpack.c.bf16 %v1756, %v1753
    %v1804 = vpack.c.bf16 %v1800, %v1797
    %s1805 = scalar_lea.vmem %s6, 16
    %v1806 = vld [vmem:[%s1805] sm:$0xf]
    %v1807 = vld [vmem:[%s1805 + $0x4] sm:$0xf]
    %v1808 = vld [vmem:[%s1805 + $0x8] sm:$0xf]
    %v1809 = vld [vmem:[%s1805 + $0xc] sm:$0xf]
    %v1812 = vunpack.c.l.b16 %v1806
    %v1813 = vunpack.c.l.b16 %v1807
    %v1814 = vpack.c.b16 %v1813, %v1812
    %v1817 = vsel %vm537, %v1803, 0
    %1819 = vmatprep.subr.bf16.mxu0 0
    %1820 = vmatpush1.bf16.msra.mxu0 0
    %1821 = vmatprep.subr.bf16.mxu0 0
    %1822 = vmatpush1.bf16.msra.mxu0 0
    %1823 = vmatprep.subr.bf16.mxu0 0
    %1824 = vmatpush1.bf16.msra.mxu0 0
    %1825 = vmatprep.subr.bf16.mxu0 0
    %1826 = vmatpush1.bf16.msra.mxu0 0
    %1827 = vmatprep.subr.bf16.mxu0 0
    %1828 = vmatpush1.bf16.msra.mxu0 0
    %1829 = vmatprep.subr.bf16.mxu0 0
    %1830 = vmatpush1.bf16.msra.mxu0 0
    %1831 = vmatprep.subr.bf16.mxu0 0
    %1832 = vmatpush1.bf16.msra.mxu0 0
    %1833 = vmatprep.subr.bf16.mxu0 0
    %1834 = vmatpush1.bf16.msra.mxu0 %v1814
    %1835 = vmatprep.subr.bf16.mxu0 0
    %1836 = vmatpush2.bf16.msra.mxu0 0
    %1837 = vmatprep.subr.bf16.mxu0 0
    %1838 = vmatpush2.bf16.msra.mxu0 0
    %1839 = vmatprep.subr.bf16.mxu0 0
    %1840 = vmatpush2.bf16.msra.mxu0 0
    %1841 = vmatprep.subr.bf16.mxu0 0
    %1842 = vmatpush2.bf16.msra.mxu0 0
    %1843 = vmatprep.subr.bf16.mxu0 0
    %1844 = vmatpush2.bf16.msra.mxu0 0
    %1845 = vmatprep.subr.bf16.mxu0 0
    %1846 = vmatpush2.bf16.msra.mxu0 0
    %1847 = vmatprep.subr.bf16.mxu0 0
    %1848 = vmatpush2.bf16.msra.mxu0 0
    %1849 = vmatprep.subr.bf16.mxu0 0
    %1850 = vmatpush2.bf16.msra.mxu0 0
    %1851 = vmatprep.mubr.bf16.mxu0 0
    %1852 = vmatmul.mubr.bf16.gmra.mxu0 %v1817
    %v1853 = vpop.f32.mrf.mxu0
    %v1854 = vadd.f32 0.0, %v1853
    %v1855 = vpop.f32.mrf.mxu0
    %v1856 = vpop.f32.mrf.mxu0
    %v1857 = vadd.f32 0.0, %v1856
    %v1858 = vpop.f32.mrf.mxu0
    %1859 = vdwg.mxu0
    %v1862 = vunpack.c.l.b16 %v1808
    %v1863 = vunpack.c.l.b16 %v1809
    %v1864 = vpack.c.b16 %v1863, %v1862
    %v1867 = vsel %vm537, %v1804, 0
    %1869 = vmatprep.subr.bf16.mxu0 0
    %1870 = vmatpush1.bf16.msra.mxu0 0
    %1871 = vmatprep.subr.bf16.mxu0 0
    %1872 = vmatpush1.bf16.msra.mxu0 0
    %1873 = vmatprep.subr.bf16.mxu0 0
    %1874 = vmatpush1.bf16.msra.mxu0 0
    %1875 = vmatprep.subr.bf16.mxu0 0
    %1876 = vmatpush1.bf16.msra.mxu0 0
    %1877 = vmatprep.subr.bf16.mxu0 0
    %1878 = vmatpush1.bf16.msra.mxu0 0
    %1879 = vmatprep.subr.bf16.mxu0 0
    %1880 = vmatpush1.bf16.msra.mxu0 0
    %1881 = vmatprep.subr.bf16.mxu0 0
    %1882 = vmatpush1.bf16.msra.mxu0 0
    %1883 = vmatprep.subr.bf16.mxu0 0
    %1884 = vmatpush1.bf16.msra.mxu0 %v1864
    %1885 = vmatprep.subr.bf16.mxu0 0
    %1886 = vmatpush2.bf16.msra.mxu0 0
    %1887 = vmatprep.subr.bf16.mxu0 0
    %1888 = vmatpush2.bf16.msra.mxu0 0
    %1889 = vmatprep.subr.bf16.mxu0 0
    %1890 = vmatpush2.bf16.msra.mxu0 0
    %1891 = vmatprep.subr.bf16.mxu0 0
    %1892 = vmatpush2.bf16.msra.mxu0 0
    %1893 = vmatprep.subr.bf16.mxu0 0
    %1894 = vmatpush2.bf16.msra.mxu0 0
    %1895 = vmatprep.subr.bf16.mxu0 0
    %1896 = vmatpush2.bf16.msra.mxu0 0
    %1897 = vmatprep.subr.bf16.mxu0 0
    %1898 = vmatpush2.bf16.msra.mxu0 0
    %1899 = vmatprep.subr.bf16.mxu0 0
    %1900 = vmatpush2.bf16.msra.mxu0 0
    %1901 = vmatprep.mubr.bf16.mxu0 0
    %1902 = vmatmul.mubr.bf16.gmra.mxu0 %v1867
    %v1903 = vpop.f32.mrf.mxu0
    %v1904 = vadd.f32 0.0, %v1903
    %v1905 = vpop.f32.mrf.mxu0
    %v1906 = vpop.f32.mrf.mxu0
    %v1907 = vadd.f32 0.0, %v1906
    %v1908 = vpop.f32.mrf.mxu0
    %1909 = vdwg.mxu0
    %v1910 = vsel %vm74, %v1854, 0.0
    %v1911 = vsel %vm74, %v1904, 0.0
    %v1912 = vadd.f32 %v1910, %v1911
    %v1913 = vsel %vm74, %v1857, 0.0
    %v1914 = vsel %vm74, %v1907, 0.0
    %v1915 = vadd.f32 %v1913, %v1914
    %v1916 = vadd.f32 %v1106, %v1912
    %v1917 = vadd.f32 %v1107, %v1915
    %s1918 = scalar_lea.vmem %s7, 1
    %v1919 = vld [vmem:[%s1918] sm:$0x1]
    %v1921 = vlaneseq
    %v1922 = vshrl.u32 %v1921, 7
    %v1923 = vsub.s32 0, %v1922
    %v1924 = vrot.slane %v1919, %v1923
    %v1926 = vadd.f32 %v1916, %v1924
    %v1927 = vadd.f32 %v1917, %v1924
    %s1928 = scalar_lea.vmem %s8, 1
    %v1929 = vld [vmem:[%s1928] sm:$0x1]
    %s1930 = scalar_lea.vmem %s9, 1
    %v1931 = vld [vmem:[%s1930] sm:$0x1]
    %v1932 = vsel %vm74, %v1926, 0.0
    %1933 = vadd.xlane.f32.xlu0 %v1932
    %v1934 = vpop.xlane.xlu0 %1933
    %v1935 = vsel %vm74, %v1927, 0.0
    %1936 = vadd.xlane.f32.xlu0 %v1935
    %v1937 = vpop.xlane.xlu0 %1936
    %v1938 = vmul.f32 %v1934, %v81
    %v1939 = vmul.f32 %v1937, %v81
    %v1940 = vsub.f32 %v1926, %v1938
    %v1941 = vsub.f32 %v1927, %v1939
    %v1942 = vmul.f32 %v1940, %v1940
    %v1943 = vmul.f32 %v1941, %v1941
    %v1944 = vsel %vm74, %v1942, 0.0
    %1945 = vadd.xlane.f32.xlu0 %v1944
    %v1946 = vpop.xlane.xlu0 %1945
    %v1947 = vsel %vm74, %v1943, 0.0
    %1948 = vadd.xlane.f32.xlu0 %v1947
    %v1949 = vpop.xlane.xlu0 %1948
    %v1950 = vmul.f32 %v1946, %v81
    %v1951 = vmul.f32 %v1949, %v81
    %v1952 = vadd.f32 %v1950, 1e-05
    %v1953 = vadd.f32 %v1951, 1e-05
    %v1954 = vrsqrt.pop %v1952
    %v1955 = vrsqrt.pop %v1953
    %v1956 = vmul.f32 %v1940, %v1954
    %v1957 = vmul.f32 %v1941, %v1955
    %v1959 = vlaneseq
    %v1960 = vshrl.u32 %v1959, 7
    %v1961 = vsub.s32 0, %v1960
    %v1962 = vrot.slane %v1929, %v1961
    %v1964 = vmul.f32 %v1956, %v1962
    %v1965 = vmul.f32 %v1957, %v1962
    %v1967 = vlaneseq
    %v1968 = vshrl.u32 %v1967, 7
    %v1969 = vsub.s32 0, %v1968
    %v1970 = vrot.slane %v1931, %v1969
    %v1972 = vadd.f32 %v1964, %v1970
    %v1973 = vadd.f32 %v1965, %v1970
    %v1974 = vpack.c.bf16 %v1973, %v1972
    %s1975 = scalar_lea.vmem %s10, 16
    %v1976 = vld [vmem:[%s1975] sm:$0xf]
    %v1977 = vld [vmem:[%s1975 + $0x4] sm:$0xf]
    %v1978 = vld [vmem:[%s1975 + $0x8] sm:$0xf]
    %v1979 = vld [vmem:[%s1975 + $0xc] sm:$0xf]
    %s1980 = scalar_lea.vmem %s11, 1
    %v1981 = vld [vmem:[%s1980] sm:$0x1]
    %v1983 = vlaneseq
    %v1984 = vshrl.u32 %v1983, 7
    %v1985 = vsub.s32 0, %v1984
    %v1986 = vrot.slane %v1981, %v1985
    %v1992 = vunpack.c.l.b16 %v1976
    %v1993 = vunpack.c.l.b16 %v1977
    %v1994 = vunpack.c.l.b16 %v1978
    %v1995 = vunpack.c.l.b16 %v1979
    %v1996 = vpack.c.b16 %v1993, %v1992
    %v1997 = vpack.c.b16 %v1995, %v1994
    %v2001 = vsel %vm74, %v1974, 0
    %2003 = vmatprep.subr.bf16.mxu0 0
    %2004 = vmatpush1.bf16.msra.mxu0 0
    %2005 = vmatprep.subr.bf16.mxu0 0
    %2006 = vmatpush1.bf16.msra.mxu0 0
    %2007 = vmatprep.subr.bf16.mxu0 0
    %2008 = vmatpush1.bf16.msra.mxu0 0
    %2009 = vmatprep.subr.bf16.mxu0 0
    %2010 = vmatpush1.bf16.msra.mxu0 0
    %2011 = vmatprep.subr.bf16.mxu0 0
    %2012 = vmatpush1.bf16.msra.mxu0 0
    %2013 = vmatprep.subr.bf16.mxu0 0
    %2014 = vmatpush1.bf16.msra.mxu0 0
    %2015 = vmatprep.subr.bf16.mxu0 0
    %2016 = vmatpush1.bf16.msra.mxu0 %v1997
    %2017 = vmatprep.subr.bf16.mxu0 0
    %2018 = vmatpush1.bf16.msra.mxu0 %v1996
    %2019 = vmatprep.subr.bf16.mxu0 0
    %2020 = vmatpush2.bf16.msra.mxu0 0
    %2021 = vmatprep.subr.bf16.mxu0 0
    %2022 = vmatpush2.bf16.msra.mxu0 0
    %2023 = vmatprep.subr.bf16.mxu0 0
    %2024 = vmatpush2.bf16.msra.mxu0 0
    %2025 = vmatprep.subr.bf16.mxu0 0
    %2026 = vmatpush2.bf16.msra.mxu0 0
    %2027 = vmatprep.subr.bf16.mxu0 0
    %2028 = vmatpush2.bf16.msra.mxu0 0
    %2029 = vmatprep.subr.bf16.mxu0 0
    %2030 = vmatpush2.bf16.msra.mxu0 0
    %2031 = vmatprep.subr.bf16.mxu0 0
    %2032 = vmatpush2.bf16.msra.mxu0 0
    %2033 = vmatprep.subr.bf16.mxu0 0
    %2034 = vmatpush2.bf16.msra.mxu0 0
    %2035 = vmatprep.mubr.bf16.mxu0 0
    %2036 = vmatmul.mubr.bf16.gmra.mxu0 %v2001
    %v2037 = vpop.f32.mrf.mxu0
    %v2038 = vadd.f32 %v1986, %v2037
    %v2039 = vpop.f32.mrf.mxu0
    %v2040 = vpop.f32.mrf.mxu0
    %v2041 = vadd.f32 %v1986, %v2040
    %v2042 = vpop.f32.mrf.mxu0
    %2043 = vdwg.mxu0
    %v2044 = vmul.f32 %v2038, 0.5
    %v2045 = vmul.f32 %v2041, 0.5
    %v2046 = vmul.f32 %v2038, 0.044715
    %v2047 = vmul.f32 %v2041, 0.044715
    %v2048 = vmul.f32 %v2046, %v2038
    %v2049 = vmul.f32 %v2047, %v2041
    %v2050 = vmul.f32 %v2048, %v2038
    %v2051 = vmul.f32 %v2049, %v2041
    %v2052 = vadd.f32 %v2038, %v2050
    %v2053 = vadd.f32 %v2041, %v2051
    %v2054 = vmul.f32 %v2052, 0.7978846
    %v2055 = vmul.f32 %v2053, 0.7978846
    %v2056 = vtanh.pop %v2054
    %v2057 = vtanh.pop %v2055
    %v2058 = vadd.f32 %v2056, 1.0
    %v2059 = vadd.f32 %v2057, 1.0
    %v2060 = vmul.f32 %v2044, %v2058
    %v2061 = vmul.f32 %v2045, %v2059
    %v2062 = vpack.c.bf16 %v2061, %v2060
    %s2063 = scalar_lea.vmem %s12, 32
    %v2064 = vld [vmem:[%s2063] sm:$0xf]
    %v2065 = vld [vmem:[%s2063 + $0x4] sm:$0xf]
    %v2066 = vld [vmem:[%s2063 + $0x8] sm:$0xf]
    %v2067 = vld [vmem:[%s2063 + $0xc] sm:$0xf]
    %v2068 = vld [vmem:[%s2063 + $0x10] sm:$0xf]
    %v2069 = vld [vmem:[%s2063 + $0x14] sm:$0xf]
    %v2070 = vld [vmem:[%s2063 + $0x18] sm:$0xf]
    %v2071 = vld [vmem:[%s2063 + $0x1c] sm:$0xf]
    %v2080 = vunpack.c.l.b16 %v2064
    %v2081 = vunpack.c.l.b16 %v2065
    %v2082 = vunpack.c.l.b16 %v2066
    %v2083 = vunpack.c.l.b16 %v2067
    %v2084 = vunpack.c.l.b16 %v2068
    %v2085 = vunpack.c.l.b16 %v2069
    %v2086 = vunpack.c.l.b16 %v2070
    %v2087 = vunpack.c.l.b16 %v2071
    %v2088 = vpack.c.b16 %v2081, %v2080
    %v2089 = vpack.c.b16 %v2083, %v2082
    %v2090 = vpack.c.b16 %v2085, %v2084
    %v2091 = vpack.c.b16 %v2087, %v2086
    %v2097 = vsel %vm1052, %v2062, 0
    %2099 = vmatprep.subr.bf16.mxu0 0
    %2100 = vmatpush1.bf16.msra.mxu0 0
    %2101 = vmatprep.subr.bf16.mxu0 0
    %2102 = vmatpush1.bf16.msra.mxu0 0
    %2103 = vmatprep.subr.bf16.mxu0 0
    %2104 = vmatpush1.bf16.msra.mxu0 0
    %2105 = vmatprep.subr.bf16.mxu0 0
    %2106 = vmatpush1.bf16.msra.mxu0 0
    %2107 = vmatprep.subr.bf16.mxu0 0
    %2108 = vmatpush1.bf16.msra.mxu0 %v2091
    %2109 = vmatprep.subr.bf16.mxu0 0
    %2110 = vmatpush1.bf16.msra.mxu0 %v2090
    %2111 = vmatprep.subr.bf16.mxu0 0
    %2112 = vmatpush1.bf16.msra.mxu0 %v2089
    %2113 = vmatprep.subr.bf16.mxu0 0
    %2114 = vmatpush1.bf16.msra.mxu0 %v2088
    %2115 = vmatprep.subr.bf16.mxu0 0
    %2116 = vmatpush2.bf16.msra.mxu0 0
    %2117 = vmatprep.subr.bf16.mxu0 0
    %2118 = vmatpush2.bf16.msra.mxu0 0
    %2119 = vmatprep.subr.bf16.mxu0 0
    %2120 = vmatpush2.bf16.msra.mxu0 0
    %2121 = vmatprep.subr.bf16.mxu0 0
    %2122 = vmatpush2.bf16.msra.mxu0 0
    %2123 = vmatprep.subr.bf16.mxu0 0
    %2124 = vmatpush2.bf16.msra.mxu0 0
    %2125 = vmatprep.subr.bf16.mxu0 0
    %2126 = vmatpush2.bf16.msra.mxu0 0
    %2127 = vmatprep.subr.bf16.mxu0 0
    %2128 = vmatpush2.bf16.msra.mxu0 0
    %2129 = vmatprep.subr.bf16.mxu0 0
    %2130 = vmatpush2.bf16.msra.mxu0 0
    %2131 = vmatprep.mubr.bf16.mxu0 0
    %2132 = vmatmul.mubr.bf16.gmra.mxu0 %v2097
    %v2133 = vpop.f32.mrf.mxu0
    %v2134 = vadd.f32 0.0, %v2133
    %v2135 = vpop.f32.mrf.mxu0
    %v2136 = vpop.f32.mrf.mxu0
    %v2137 = vadd.f32 0.0, %v2136
    %v2138 = vpop.f32.mrf.mxu0
    %2139 = vdwg.mxu0
    %v2140 = vadd.f32 %v1926, %v2134
    %v2141 = vadd.f32 %v1927, %v2137
    %s2142 = scalar_lea.vmem %s13, 1
    %v2143 = vld [vmem:[%s2142] sm:$0x1]
    %v2145 = vlaneseq
    %v2146 = vshrl.u32 %v2145, 7
    %v2147 = vsub.s32 0, %v2146
    %v2148 = vrot.slane %v2143, %v2147
    %v2150 = vadd.f32 %v2140, %v2148
    %v2151 = vadd.f32 %v2141, %v2148
    %v2152 = vld [vmem:[%s14] sm:$0x1]
    %v2153 = vld [vmem:[%s15] sm:$0x1]
    %v2156 = vrot.slane %v2151, 7
    %vm2157 = vcmask 1041409
    %v2158 = vsel %vm2157, %v2156, %v2150
    %vm2160 = vcmask 254976
    %v2161 = vsel %vm2160, %v2158, 0.0
    %2162 = vadd.xlane.f32.xlu0 %v2161
    %v2163 = vpop.xlane.xlu0 %2162
    %v2164 = vmul.f32 %v2163, %v81
    %v2166 = vrot.slane %v2164, 1
    %v2169 = vsub.f32 %v2150, %v2164
    %v2170 = vsub.f32 %v2151, %v2166
    %v2171 = vmul.f32 %v2169, %v2169
    %v2172 = vmul.f32 %v2170, %v2170
    %v2175 = vrot.slane %v2172, 7
    %v2176 = vsel %vm2157, %v2175, %v2171
    %v2178 = vsel %vm2160, %v2176, 0.0
    %2179 = vadd.xlane.f32.xlu0 %v2178
    %v2180 = vpop.xlane.xlu0 %2179
    %v2181 = vmul.f32 %v2180, %v81
    %v2182 = vadd.f32 %v2181, 1e-05
    %v2183 = vrsqrt.pop %v2182
    %v2185 = vrot.slane %v2183, 1
    %v2188 = vmul.f32 %v2169, %v2183
    %v2189 = vmul.f32 %v2170, %v2185
    %v2191 = vlaneseq
    %v2192 = vshrl.u32 %v2191, 7
    %v2193 = vsub.s32 0, %v2192
    %v2194 = vrot.slane %v2152, %v2193
    %v2196 = vmul.f32 %v2188, %v2194
    %v2197 = vmul.f32 %v2189, %v2194
    %v2199 = vlaneseq
    %v2200 = vshrl.u32 %v2199, 7
    %v2201 = vsub.s32 0, %v2200
    %v2202 = vrot.slane %v2153, %v2201
    %v2204 = vadd.f32 %v2196, %v2202
    %v2205 = vadd.f32 %v2197, %v2202
    %v2206 = vld [vmem:[%s16] sm:$0x1]
    %v2208 = vlaneseq
    %v2209 = vshrl.u32 %v2208, 7
    %v2210 = vsub.s32 0, %v2209
    %v2211 = vrot.slane %v2206, %v2210
    %v2213 = vmul.f32 %v2204, %v2211
    %v2214 = vmul.f32 %v2205, %v2211
    %v2217 = vrot.slane %v2214, 7
    %v2218 = vsel %vm2157, %v2217, %v2213
    %v2220 = vsel %vm2160, %v2218, 0.0
    %2221 = vadd.xlane.f32.xlu0 %v2220
    %v2222 = vpop.xlane.xlu0 %2221
    %v2223 = vld [vmem:[#allocation2] sm:$0x1]
    %v2225 = vlaneseq
    %v2226 = vshrl.u32 %v2225, 7
    %v2227 = vsub.s32 0, %v2226
    %v2228 = vrot.slane %v2223, %v2227
    %v2230 = vadd.f32 %v2222, %v2228
    %vm2231 = vcmask 1024
    %2232 = vst.msk [vmem:[%s19] sm:$0x3] %vm2231, %v2230
    %v2233 = vld [vmem:[%s18] sm:$0x3]
    %v2234 = vmax.f32 %v2230, 0.0
    %v2235 = vmul.f32 %v2230, %v2233
    %v2236 = vsub.f32 %v2234, %v2235
    %v2237 = vand.u32 2147483647, %v2230
    %v2238 = vsub.f32 0.0, %v2237
    %v2239 = vmul.f32 %v2238, 1.442695
    %v2240 = vpow.pop %v2239
    %v2241 = vadd.f32 %v2240, 1.0
    %v2242 = vlog2.pop %v2241
    %v2243 = vmul.f32 %v2242, 0.6931472
    %v2244 = vadd.f32 %v2236, %v2243
    %v2245 = vsel %vm2231, %v2244, 0.0
    %2246 = vadd.xlane.f32.xlu0 %v2245
    %v2247 = vpop.xlane.xlu0 %2246
    %v2248 = vrot.slane %v2247, 4
    %v2249 = vadd.f32 %v2247, %v2248
    %v2250 = vrot.slane %v2249, 2
    %v2251 = vadd.f32 %v2249, %v2250
    %v2252 = vrot.slane %v2251, 1
    %v2253 = vadd.f32 %v2251, %v2252
    %s2254 = vtos %v2253
    %v2255 = vstv %s2254
    %v2256 = vrcp.pop 2.0
    %v2257 = vmul.f32 %v2255, %v2256
    %vm2258 = vcmask 0
    %2259 = vst.msk [vmem:[#allocation3] sm:$0x1] %vm2258, %v2257
    // Predicated region
    $region78: #{reward_model_forward.1} parent=1 // pred_check
      _
    $region79: #{reward_model_forward.1} parent=1 // pred_check_branch
      %2261 = sbr.rel (0) target = $region81
    $region80: #{reward_model_forward.1} parent=1 // pred_region
      _
    $region81: #{reward_model_forward.1} parent=1 // pred_fallthru
      _
    // Predicated region
    $region82: #{reward_model_forward.1} parent=1 // pred_check
      _
    $region83: #{reward_model_forward.1} parent=1 // pred_check_branch
      %2263 = sbr.rel (0) target = $region85
    $region84: #{reward_model_forward.1} parent=1 // pred_region
      %s2265 = ssub.s32 16, 16
      %2266 = vsyncadd [#allocation4], %s2265
      %s2268 = sshll.u32 [#allocation3], 4
      %s2269 = int_to_ptr.vmem [resolvable:$true] %s2268
      %2271 = dma.vmem_to_hbm [thread:$0]  %s2269, 16, %s20, [#allocation4]
    $region85: #{reward_model_forward.1} parent=1 // pred_fallthru
      _
    // Predicated region
    $region86: #{reward_model_forward.1} parent=1 // pred_check
      _
    $region87: #{reward_model_forward.1} parent=1 // pred_check_branch
      %2273 = sbr.rel (0) target = $region89
    $region88: #{reward_model_forward.1} parent=1 // pred_region
      _
    $region89: #{reward_model_forward.1} parent=1 // pred_fallthru
      _
    // Predicated region
    $region90: #{reward_model_forward.1} parent=1 // pred_check
      _
    $region91: #{reward_model_forward.1} parent=1 // pred_check_branch
      %2275 = sbr.rel (0) target = $region93
    $region92: #{reward_model_forward.1} parent=1 // pred_region
      %2276 = dma.done [#allocation4], 16
    $region93: #{reward_model_forward.1} parent=1 // pred_fallthru
      _
    %2277 = vsyncpa [#allocation4], 1

</llo_original>
